<compile_context>
chip_gen: v7x
topology: tpu7x:2x2x1
jax: 0.10.0
libtpu: 0.0.40
codegen_flags: <defaults>
</compile_context>

<pallas_src>
import math
from functools import partial

import jax
import jax.numpy as jnp
from jax import lax
from jax.experimental import pallas as pl
from jax.experimental.pallas import tpu as pltpu


def _round_up(x, m):
    return ((x + m - 1) // m) * m


def _vmem_limit_bytes():
    # v5e / v6e: 128 MiB physical VMEM -> allow ~96 MiB for bigger tiles.
    # v7x: only 64 MiB per TensorCore -> cap at ~48 MiB (headroom for compiler
    # scratch + double buffering).
    try:
        cap = pltpu.get_tpu_info().vmem_capacity_bytes
        return int(min(96 * 2**20, (cap * 3) // 4))
    except Exception:
        return 48 * 2**20


# ---------------------------------------------------------------------------
# Pallas kernel: build im2col patch in VMEM -> single big-K MXU dot ->
# bias + LeakyReLU(0.2) epilogue.
# ---------------------------------------------------------------------------
def _dblock_conv_kernel(x_ref, xh_ref, w_ref, b_ref, o_ref, patch_ref, *,
                        kh, kw, ow, toh, cin_p):
    # x_ref  : (1, TOH,  Wp, Cin_p)        bf16   main OH tile
    # xh_ref : (1, HALO, Wp, Cin_p)        bf16   rows just below the tile (halo)
    # w_ref  : (kh*kw*Cin_p, COUT_TILE)    bf16   (tap, cin)-flattened weights
    # b_ref  : (1, COUT_TILE)              f32
    # o_ref  : (1, TOH*OW, COUT_TILE)      f32
    # patch_ref (VMEM scratch): (TOH*OW, kh*kw*Cin_p) bf16
    co = pl.program_id(2)

    # Build the patch once per (n, oh-tile); it is reused for every COUT tile
    # (co is the innermost, "arbitrary" grid axis).
    @pl.when(co == 0)
    def _build_patch():
        # TODO(synk): the j-shifted W slices still cost a sublane-shift relayout
        # per tap; a pltpu.roll-based variant could move that work to the XLU.
        for i in range(kh):
            for j in range(kw):
                c0 = (i * kw + j) * cin_p
                cs = slice(c0, c0 + cin_p)
                if i == 0:
                    patch_ref[:, cs] = (
                        x_ref[0, :, j:j + ow, :].reshape(toh * ow, cin_p))
                else:
                    # output rows [0, toh-i) read the main tile; the last i rows
                    # need the halo rows below the tile.
                    split = (toh - i) * ow
                    patch_ref[:split, cs] = (
                        x_ref[0, i:, j:j + ow, :].reshape(split, cin_p))
                    patch_ref[split:, cs] = (
                        xh_ref[0, :i, j:j + ow, :].reshape(i * ow, cin_p))

    # Single large-K contraction (K = kh*kw*Cin_p): MXU accumulates internally,
    # so there are no per-tap VPU adds and no big live f32 accumulator.
    acc = jnp.dot(patch_ref[...], w_ref[...], preferred_element_type=jnp.float32)
    acc = acc + b_ref[...]
    o_ref[0] = jnp.maximum(acc, 0.2 * acc).astype(o_ref.dtype)   # LeakyReLU(0.2)


# ---------------------------------------------------------------------------
# Parameter setup (nn.Conv2d + xavier_uniform_ + zero bias)
# ---------------------------------------------------------------------------
def make_dblock_params(key, in_channels, out_channels, kernel_size):
    kh, kw = kernel_size
    fan_in = in_channels * kh * kw
    fan_out = out_channels * kh * kw
    bound = math.sqrt(6.0 / (fan_in + fan_out))  # xavier_uniform_, gain=1
    weight = jax.random.uniform(
        key, (out_channels, in_channels, kh, kw),
        minval=-bound, maxval=bound, dtype=jnp.float32)
    bias = jnp.zeros((out_channels,), dtype=jnp.float32)
    return weight, bias


def spectral_normalize(weight, n_iter=20, eps=1e-12):
    # TODO(synk): torch.nn.utils.spectral_norm keeps a persistent `u` buffer and
    # does 1 power iteration per forward; here we run n_iter fresh iterations
    # from a deterministic start (stateless JAX), which converges to the same
    # sigma but is not bit-identical to a mid-training PyTorch checkpoint.
    cout = weight.shape[0]
    w_mat = weight.reshape(cout, -1)
    u = jnp.ones((cout,), dtype=jnp.float32)
    u = u / (jnp.linalg.norm(u) + eps)
    for _ in range(n_iter):
        v = w_mat.T @ u
        v = v / (jnp.linalg.norm(v) + eps)
        u = w_mat @ v
        u = u / (jnp.linalg.norm(u) + eps)
    sigma = u @ (w_mat @ v)
    return weight / sigma


# ---------------------------------------------------------------------------
# Forward: layout glue (NCHW->NHWC, pads) + fused Pallas conv kernel
# ---------------------------------------------------------------------------
def dblock_forward(x_nchw, weight, bias, *, stride=(1, 1), padding=(0, 0),
                   toh=None, out_dtype=jnp.float32):
    N, C, H, W = x_nchw.shape
    Cout, Cin, kh, kw = weight.shape
    assert Cin == C
    sh, sw = stride
    ph, pw = padding
    # TODO(synk): only stride=(1,1) is fused; stride-2 downsampling DBlocks need
    # strided patch gathers and are not covered by this kernel.
    assert (sh, sw) == (1, 1), "Pallas DBlock kernel currently supports stride=1"

    w_sn = spectral_normalize(weight)

    Hp, Wp = H + 2 * ph, W + 2 * pw
    OH, OW = Hp - kh + 1, Wp - kw + 1

    # bf16 sublane packing -> pad Cin to a multiple of 16.
    cin_p = _round_up(Cin, 16)

    # Lane-dense output tiles; 256-wide when the layer is wide enough
    # (full-width MXU tiles on v6e/v7x).
    cout_tile = 256 if Cout > 128 else 128
    cout_p = _round_up(Cout, cout_tile)
    n_co = cout_p // cout_tile

    # --- OH tiling; halo of kh-1 rows via a second 8-row block view of x ---
    halo = max(8, _round_up(kh - 1, 8))
    if toh is None:
        toh = max(halo, (max(1, 1024 // max(OW, 1)) // halo) * halo)  # ~1K rows/step
    toh = max(halo, _round_up(min(toh, _round_up(OH, halo)), halo))
    if (toh * OW) % 8 != 0:
        toh = _round_up(OH, halo)        # fall back to a single spatial tile
    n_oh = -(-OH // toh)
    oh_p = n_oh * toh
    h_tot = oh_p + halo                   # keeps main + last halo block in-bounds
    halo_blk = toh // halo

    # input: NCHW -> zero-padded NHWC bf16, H padded up to h_tot
    x_nhwc = jnp.transpose(x_nchw, (0, 2, 3, 1)).astype(jnp.bfloat16)
    xp = jnp.pad(x_nhwc, ((0, 0), (ph, h_tot - H - ph), (pw, pw), (0, cin_p - Cin)))

    # weights: (Cout, Cin, kh, kw) -> (kh*kw*cin_p, cout_p), bf16, (tap, cin) order
    w_t = jnp.transpose(w_sn, (2, 3, 1, 0))                      # (kh, kw, Cin, Cout)
    w_t = jnp.pad(w_t, ((0, 0), (0, 0), (0, cin_p - Cin), (0, cout_p - Cout)))
    w_flat = w_t.reshape(kh * kw * cin_p, cout_p).astype(jnp.bfloat16)

    b_r = jnp.pad(bias, (0, cout_p - Cout)).reshape(1, cout_p).astype(jnp.float32)

    kernel = partial(_dblock_conv_kernel, kh=kh, kw=kw, ow=OW, toh=toh, cin_p=cin_p)

    kdim = kh * kw * cin_p
    flops = 2 * N * n_oh * (toh * OW) * kdim * cout_p
    bytes_accessed = (
        N * n_oh * (toh + halo) * Wp * cin_p * 2                 # x tiles (+halo)
        + N * n_oh * kdim * cout_p * 2                           # weight restream
        + N * oh_p * OW * cout_p * jnp.dtype(out_dtype).itemsize)  # output

    out = pl.pallas_call(
        kernel,
        out_shape=jax.ShapeDtypeStruct((N, oh_p * OW, cout_p), out_dtype),
        grid_spec=pltpu.PrefetchScalarGridSpec(
            num_scalar_prefetch=0,
            # co innermost keeps the activation tile + patch scratch resident and
            # restreams weight tiles; for late layers (tiny HxW, huge Cout*Cin)
            # the opposite ordering would be preferable.
            grid=(N, n_oh, n_co),
            in_specs=[
                pl.BlockSpec((1, toh, Wp, cin_p), lambda n, t, co: (n, t, 0, 0)),
                pl.BlockSpec((1, halo, Wp, cin_p),
                             lambda n, t, co: (n, (t + 1) * halo_blk, 0, 0)),
                pl.BlockSpec((kdim, cout_tile), lambda n, t, co: (0, co)),
                pl.BlockSpec((1, cout_tile), lambda n, t, co: (0, co)),
            ],
            out_specs=pl.BlockSpec((1, toh * OW, cout_tile),
                                   lambda n, t, co: (n, t, co)),
            scratch_shapes=[pltpu.VMEM((toh * OW, kdim), jnp.bfloat16)],
        ),
        compiler_params=pltpu.CompilerParams(
            # co axis reuses the patch scratch -> must stay "arbitrary";
            # batch / oh-tile axes are independent (megacore-shardable).
            dimension_semantics=("parallel", "parallel", "arbitrary"),
            vmem_limit_bytes=_vmem_limit_bytes(),
        ),
        cost_estimate=pl.CostEstimate(
            flops=flops, transcendentals=0, bytes_accessed=bytes_accessed),
    )(xp, xp, w_flat, b_r)

    out = out.reshape(N, oh_p, OW, cout_p)[:, :OH, :, :Cout]
    # NCHW f32 to match the PyTorch module's output.  (A fused discriminator
    # pipeline would keep NHWC/bf16 here and skip this extra HBM pass.)
    return jnp.transpose(out, (0, 3, 1, 2)).astype(jnp.float32)


# ---------------------------------------------------------------------------
if __name__ == "__main__":
    key = jax.random.PRNGKey(0)
    k_x, k_w = jax.random.split(key)

    N, Cin, H, W = 2, 4, 16, 16
    Cout = 8
    kernel_size = (3, 3)
    stride = (1, 1)
    padding = (1, 1)

    x = jax.random.normal(k_x, (N, Cin, H, W), dtype=jnp.float32)
    weight, bias = make_dblock_params(k_w, Cin, Cout, kernel_size)

    # toh=8 -> two spatial tiles per image: exercises OH tiling + halo blocks.
    y = dblock_forward(x, weight, bias, stride=stride, padding=padding, toh=8)
    y = jax.block_until_ready(y)

    # reference: plain-JAX conv + bias + LeakyReLU on the same bf16-rounded inputs
    w_sn = spectral_normalize(weight)
    x_bf = x.astype(jnp.bfloat16).astype(jnp.float32)
    w_bf = w_sn.astype(jnp.bfloat16).astype(jnp.float32)
    y_ref = lax.conv_general_dilated(
        x_bf, w_bf, window_strides=stride, padding=[padding, padding],
        dimension_numbers=("NCHW", "OIHW", "NCHW"),
        precision=lax.Precision.HIGHEST,
        preferred_element_type=jnp.float32)
    y_ref = y_ref + bias.reshape(1, Cout, 1, 1)
    y_ref = jnp.where(y_ref > 0, y_ref, 0.2 * y_ref)

    assert y.shape == (N, Cout, H, W), y.shape
    err = jnp.max(jnp.abs(y - y_ref))
    assert err < 5e-3, err

    print("KERNEL_OK")
</pallas_src>

<mosaic_0001>
module attributes {stable_mosaic.version = 11 : i64} {
  func.func @_dblock_conv_kernel(%arg0: i32, %arg1: i32, %arg2: i32, %arg3: memref<1x8x18x16xbf16, #tpu.memory_space<vmem>>, %arg4: memref<1x8x18x16xbf16, #tpu.memory_space<vmem>>, %arg5: memref<144x128xbf16, #tpu.memory_space<vmem>>, %arg6: memref<1x128xf32, #tpu.memory_space<vmem>>, %arg7: memref<1x128x128xf32, #tpu.memory_space<vmem>>, %arg8: memref<128x144xbf16, #tpu.memory_space<vmem>>) attributes {dimension_semantics = [#tpu.dimension_semantics<parallel>, #tpu.dimension_semantics<parallel>, #tpu.dimension_semantics<arbitrary>], iteration_bounds = array<i64: 2, 2, 1>, scalar_prefetch = 0 : i64, scratch_operands = 1 : i64, tpu.core_type = #tpu.core_type<tc>, window_params = [{transform_indices = @transform_0, window_bounds = array<i64: 1, 8, 18, 16>}, {transform_indices = @transform_1, window_bounds = array<i64: 1, 8, 18, 16>}, {transform_indices = @transform_2, window_bounds = array<i64: 144, 128>}, {transform_indices = @transform_3, window_bounds = array<i64: 1, 128>}, {transform_indices = @transform_4, window_bounds = array<i64: 1, 128, 128>}]} {
    %c0_i32 = arith.constant 0 : i32
    %0 = arith.cmpi eq, %arg2, %c0_i32 : i32
    %1 = arith.extui %0 : i1 to i32
    %c0_i32_0 = arith.constant 0 : i32
    %2 = arith.cmpi ne, %1, %c0_i32_0 : i32
    scf.if %2 {
      %c0_10 = arith.constant 0 : index
      %c0_11 = arith.constant 0 : index
      %c0_12 = arith.constant 0 : index
      %c0_13 = arith.constant 0 : index
      %15 = vector.load %arg3[%c0_10, %c0_11, %c0_12, %c0_13] : memref<1x8x18x16xbf16, #tpu.memory_space<vmem>>, vector<1x8x16x16xbf16>
      %16 = vector.shape_cast %15 : vector<1x8x16x16xbf16> to vector<8x16x16xbf16>
      %17 = vector.shape_cast %16 : vector<8x16x16xbf16> to vector<128x16xbf16>
      %c0_14 = arith.constant 0 : index
      %c0_15 = arith.constant 0 : index
      %18 = vector.load %arg8[%c0_14, %c0_15] : memref<128x144xbf16, #tpu.memory_space<vmem>>, vector<128x16xbf16>
      tpu.vector_store %arg8[%c0_14, %c0_15], %17 {strides = array<i32>} : memref<128x144xbf16, #tpu.memory_space<vmem>>, vector<128x16xbf16>,
      %c0_16 = arith.constant 0 : index
      %c0_17 = arith.constant 0 : index
      %c1 = arith.constant 1 : index
      %c0_18 = arith.constant 0 : index
      %19 = vector.load %arg3[%c0_16, %c0_17, %c1, %c0_18] : memref<1x8x18x16xbf16, #tpu.memory_space<vmem>>, vector<1x8x16x16xbf16>
      %20 = vector.shape_cast %19 : vector<1x8x16x16xbf16> to vector<8x16x16xbf16>
      %21 = vector.shape_cast %20 : vector<8x16x16xbf16> to vector<128x16xbf16>
      %c0_19 = arith.constant 0 : index
      %c16 = arith.constant 16 : index
      %22 = vector.load %arg8[%c0_19, %c16] : memref<128x144xbf16, #tpu.memory_space<vmem>>, vector<128x16xbf16>
      tpu.vector_store %arg8[%c0_19, %c16], %21 {strides = array<i32>} : memref<128x144xbf16, #tpu.memory_space<vmem>>, vector<128x16xbf16>,
      %c0_20 = arith.constant 0 : index
      %c0_21 = arith.constant 0 : index
      %c2 = arith.constant 2 : index
      %c0_22 = arith.constant 0 : index
      %23 = vector.load %arg3[%c0_20, %c0_21, %c2, %c0_22] : memref<1x8x18x16xbf16, #tpu.memory_space<vmem>>, vector<1x8x16x16xbf16>
      %24 = vector.shape_cast %23 : vector<1x8x16x16xbf16> to vector<8x16x16xbf16>
      %25 = vector.shape_cast %24 : vector<8x16x16xbf16> to vector<128x16xbf16>
      %c0_23 = arith.constant 0 : index
      %c32 = arith.constant 32 : index
      %26 = vector.load %arg8[%c0_23, %c32] : memref<128x144xbf16, #tpu.memory_space<vmem>>, vector<128x16xbf16>
      tpu.vector_store %arg8[%c0_23, %c32], %25 {strides = array<i32>} : memref<128x144xbf16, #tpu.memory_space<vmem>>, vector<128x16xbf16>,
      %c0_24 = arith.constant 0 : index
      %c1_25 = arith.constant 1 : index
      %c0_26 = arith.constant 0 : index
      %c0_27 = arith.constant 0 : index
      %27 = vector.load %arg3[%c0_24, %c1_25, %c0_26, %c0_27] : memref<1x8x18x16xbf16, #tpu.memory_space<vmem>>, vector<1x7x16x16xbf16>
      %28 = vector.shape_cast %27 : vector<1x7x16x16xbf16> to vector<7x16x16xbf16>
      %29 = vector.shape_cast %28 : vector<7x16x16xbf16> to vector<112x16xbf16>
      %c0_28 = arith.constant 0 : index
      %c48 = arith.constant 48 : index
      %30 = vector.load %arg8[%c0_28, %c48] : memref<128x144xbf16, #tpu.memory_space<vmem>>, vector<112x16xbf16>
      tpu.vector_store %arg8[%c0_28, %c48], %29 {strides = array<i32>} : memref<128x144xbf16, #tpu.memory_space<vmem>>, vector<112x16xbf16>,
      %c0_29 = arith.constant 0 : index
      %c0_30 = arith.constant 0 : index
      %c0_31 = arith.constant 0 : index
      %c0_32 = arith.constant 0 : index
      %31 = vector.load %arg4[%c0_29, %c0_30, %c0_31, %c0_32] : memref<1x8x18x16xbf16, #tpu.memory_space<vmem>>, vector<1x1x16x16xbf16>
      %32 = vector.shape_cast %31 : vector<1x1x16x16xbf16> to vector<1x16x16xbf16>
      %33 = vector.shape_cast %32 : vector<1x16x16xbf16> to vector<16x16xbf16>
      %c112 = arith.constant 112 : index
      %c48_33 = arith.constant 48 : index
      %34 = vector.load %arg8[%c112, %c48_33] : memref<128x144xbf16, #tpu.memory_space<vmem>>, vector<16x16xbf16>
      tpu.vector_store %arg8[%c112, %c48_33], %33 {strides = array<i32>} : memref<128x144xbf16, #tpu.memory_space<vmem>>, vector<16x16xbf16>,
      %c0_34 = arith.constant 0 : index
      %c1_35 = arith.constant 1 : index
      %c1_36 = arith.constant 1 : index
      %c0_37 = arith.constant 0 : index
      %35 = vector.load %arg3[%c0_34, %c1_35, %c1_36, %c0_37] : memref<1x8x18x16xbf16, #tpu.memory_space<vmem>>, vector<1x7x16x16xbf16>
      %36 = vector.shape_cast %35 : vector<1x7x16x16xbf16> to vector<7x16x16xbf16>
      %37 = vector.shape_cast %36 : vector<7x16x16xbf16> to vector<112x16xbf16>
      %c0_38 = arith.constant 0 : index
      %c64 = arith.constant 64 : index
      %38 = vector.load %arg8[%c0_38, %c64] : memref<128x144xbf16, #tpu.memory_space<vmem>>, vector<112x16xbf16>
      tpu.vector_store %arg8[%c0_38, %c64], %37 {strides = array<i32>} : memref<128x144xbf16, #tpu.memory_space<vmem>>, vector<112x16xbf16>,
      %c0_39 = arith.constant 0 : index
      %c0_40 = arith.constant 0 : index
      %c1_41 = arith.constant 1 : index
      %c0_42 = arith.constant 0 : index
      %39 = vector.load %arg4[%c0_39, %c0_40, %c1_41, %c0_42] : memref<1x8x18x16xbf16, #tpu.memory_space<vmem>>, vector<1x1x16x16xbf16>
      %40 = vector.shape_cast %39 : vector<1x1x16x16xbf16> to vector<1x16x16xbf16>
      %41 = vector.shape_cast %40 : vector<1x16x16xbf16> to vector<16x16xbf16>
      %c112_43 = arith.constant 112 : index
      %c64_44 = arith.constant 64 : index
      %42 = vector.load %arg8[%c112_43, %c64_44] : memref<128x144xbf16, #tpu.memory_space<vmem>>, vector<16x16xbf16>
      tpu.vector_store %arg8[%c112_43, %c64_44], %41 {strides = array<i32>} : memref<128x144xbf16, #tpu.memory_space<vmem>>, vector<16x16xbf16>,
      %c0_45 = arith.constant 0 : index
      %c1_46 = arith.constant 1 : index
      %c2_47 = arith.constant 2 : index
      %c0_48 = arith.constant 0 : index
      %43 = vector.load %arg3[%c0_45, %c1_46, %c2_47, %c0_48] : memref<1x8x18x16xbf16, #tpu.memory_space<vmem>>, vector<1x7x16x16xbf16>
      %44 = vector.shape_cast %43 : vector<1x7x16x16xbf16> to vector<7x16x16xbf16>
      %45 = vector.shape_cast %44 : vector<7x16x16xbf16> to vector<112x16xbf16>
      %c0_49 = arith.constant 0 : index
      %c80 = arith.constant 80 : index
      %46 = vector.load %arg8[%c0_49, %c80] : memref<128x144xbf16, #tpu.memory_space<vmem>>, vector<112x16xbf16>
      tpu.vector_store %arg8[%c0_49, %c80], %45 {strides = array<i32>} : memref<128x144xbf16, #tpu.memory_space<vmem>>, vector<112x16xbf16>,
      %c0_50 = arith.constant 0 : index
      %c0_51 = arith.constant 0 : index
      %c2_52 = arith.constant 2 : index
      %c0_53 = arith.constant 0 : index
      %47 = vector.load %arg4[%c0_50, %c0_51, %c2_52, %c0_53] : memref<1x8x18x16xbf16, #tpu.memory_space<vmem>>, vector<1x1x16x16xbf16>
      %48 = vector.shape_cast %47 : vector<1x1x16x16xbf16> to vector<1x16x16xbf16>
      %49 = vector.shape_cast %48 : vector<1x16x16xbf16> to vector<16x16xbf16>
      %c112_54 = arith.constant 112 : index
      %c80_55 = arith.constant 80 : index
      %50 = vector.load %arg8[%c112_54, %c80_55] : memref<128x144xbf16, #tpu.memory_space<vmem>>, vector<16x16xbf16>
      tpu.vector_store %arg8[%c112_54, %c80_55], %49 {strides = array<i32>} : memref<128x144xbf16, #tpu.memory_space<vmem>>, vector<16x16xbf16>,
      %c0_56 = arith.constant 0 : index
      %c2_57 = arith.constant 2 : index
      %c0_58 = arith.constant 0 : index
      %c0_59 = arith.constant 0 : index
      %51 = vector.load %arg3[%c0_56, %c2_57, %c0_58, %c0_59] : memref<1x8x18x16xbf16, #tpu.memory_space<vmem>>, vector<1x6x16x16xbf16>
      %52 = vector.shape_cast %51 : vector<1x6x16x16xbf16> to vector<6x16x16xbf16>
      %53 = vector.shape_cast %52 : vector<6x16x16xbf16> to vector<96x16xbf16>
      %c0_60 = arith.constant 0 : index
      %c96 = arith.constant 96 : index
      %54 = vector.load %arg8[%c0_60, %c96] : memref<128x144xbf16, #tpu.memory_space<vmem>>, vector<96x16xbf16>
      tpu.vector_store %arg8[%c0_60, %c96], %53 {strides = array<i32>} : memref<128x144xbf16, #tpu.memory_space<vmem>>, vector<96x16xbf16>,
      %c0_61 = arith.constant 0 : index
      %c0_62 = arith.constant 0 : index
      %c0_63 = arith.constant 0 : index
      %c0_64 = arith.constant 0 : index
      %55 = vector.load %arg4[%c0_61, %c0_62, %c0_63, %c0_64] : memref<1x8x18x16xbf16, #tpu.memory_space<vmem>>, vector<1x2x16x16xbf16>
      %56 = vector.shape_cast %55 : vector<1x2x16x16xbf16> to vector<2x16x16xbf16>
      %57 = vector.shape_cast %56 : vector<2x16x16xbf16> to vector<32x16xbf16>
      %c96_65 = arith.constant 96 : index
      %c96_66 = arith.constant 96 : index
      %58 = vector.load %arg8[%c96_65, %c96_66] : memref<128x144xbf16, #tpu.memory_space<vmem>>, vector<32x16xbf16>
      tpu.vector_store %arg8[%c96_65, %c96_66], %57 {strides = array<i32>} : memref<128x144xbf16, #tpu.memory_space<vmem>>, vector<32x16xbf16>,
      %c0_67 = arith.constant 0 : index
      %c2_68 = arith.constant 2 : index
      %c1_69 = arith.constant 1 : index
      %c0_70 = arith.constant 0 : index
      %59 = vector.load %arg3[%c0_67, %c2_68, %c1_69, %c0_70] : memref<1x8x18x16xbf16, #tpu.memory_space<vmem>>, vector<1x6x16x16xbf16>
      %60 = vector.shape_cast %59 : vector<1x6x16x16xbf16> to vector<6x16x16xbf16>
      %61 = vector.shape_cast %60 : vector<6x16x16xbf16> to vector<96x16xbf16>
      %c0_71 = arith.constant 0 : index
      %c112_72 = arith.constant 112 : index
      %62 = vector.load %arg8[%c0_71, %c112_72] : memref<128x144xbf16, #tpu.memory_space<vmem>>, vector<96x16xbf16>
      tpu.vector_store %arg8[%c0_71, %c112_72], %61 {strides = array<i32>} : memref<128x144xbf16, #tpu.memory_space<vmem>>, vector<96x16xbf16>,
      %c0_73 = arith.constant 0 : index
      %c0_74 = arith.constant 0 : index
      %c1_75 = arith.constant 1 : index
      %c0_76 = arith.constant 0 : index
      %63 = vector.load %arg4[%c0_73, %c0_74, %c1_75, %c0_76] : memref<1x8x18x16xbf16, #tpu.memory_space<vmem>>, vector<1x2x16x16xbf16>
      %64 = vector.shape_cast %63 : vector<1x2x16x16xbf16> to vector<2x16x16xbf16>
      %65 = vector.shape_cast %64 : vector<2x16x16xbf16> to vector<32x16xbf16>
      %c96_77 = arith.constant 96 : index
      %c112_78 = arith.constant 112 : index
      %66 = vector.load %arg8[%c96_77, %c112_78] : memref<128x144xbf16, #tpu.memory_space<vmem>>, vector<32x16xbf16>
      tpu.vector_store %arg8[%c96_77, %c112_78], %65 {strides = array<i32>} : memref<128x144xbf16, #tpu.memory_space<vmem>>, vector<32x16xbf16>,
      %c0_79 = arith.constant 0 : index
      %c2_80 = arith.constant 2 : index
      %c2_81 = arith.constant 2 : index
      %c0_82 = arith.constant 0 : index
      %67 = vector.load %arg3[%c0_79, %c2_80, %c2_81, %c0_82] : memref<1x8x18x16xbf16, #tpu.memory_space<vmem>>, vector<1x6x16x16xbf16>
      %68 = vector.shape_cast %67 : vector<1x6x16x16xbf16> to vector<6x16x16xbf16>
      %69 = vector.shape_cast %68 : vector<6x16x16xbf16> to vector<96x16xbf16>
      %c0_83 = arith.constant 0 : index
      %c128 = arith.constant 128 : index
      %70 = vector.load %arg8[%c0_83, %c128] : memref<128x144xbf16, #tpu.memory_space<vmem>>, vector<96x16xbf16>
      tpu.vector_store %arg8[%c0_83, %c128], %69 {strides = array<i32>} : memref<128x144xbf16, #tpu.memory_space<vmem>>, vector<96x16xbf16>,
      %c0_84 = arith.constant 0 : index
      %c0_85 = arith.constant 0 : index
      %c2_86 = arith.constant 2 : index
      %c0_87 = arith.constant 0 : index
      %71 = vector.load %arg4[%c0_84, %c0_85, %c2_86, %c0_87] : memref<1x8x18x16xbf16, #tpu.memory_space<vmem>>, vector<1x2x16x16xbf16>
      %72 = vector.shape_cast %71 : vector<1x2x16x16xbf16> to vector<2x16x16xbf16>
      %73 = vector.shape_cast %72 : vector<2x16x16xbf16> to vector<32x16xbf16>
      %c96_88 = arith.constant 96 : index
      %c128_89 = arith.constant 128 : index
      %74 = vector.load %arg8[%c96_88, %c128_89] : memref<128x144xbf16, #tpu.memory_space<vmem>>, vector<32x16xbf16>
      tpu.vector_store %arg8[%c96_88, %c128_89], %73 {strides = array<i32>} : memref<128x144xbf16, #tpu.memory_space<vmem>>, vector<32x16xbf16>,
    } else {
    }
    %c0 = arith.constant 0 : index
    %c0_1 = arith.constant 0 : index
    %3 = vector.load %arg8[%c0, %c0_1] : memref<128x144xbf16, #tpu.memory_space<vmem>>, vector<128x144xbf16>
    %c0_2 = arith.constant 0 : index
    %c0_3 = arith.constant 0 : index
    %4 = vector.load %arg5[%c0_2, %c0_3] : memref<144x128xbf16, #tpu.memory_space<vmem>>, vector<144x128xbf16>
    %cst = arith.constant dense<0.000000e+00> : vector<128x128xf32>
    %5 = tpu.matmul %3, %4, %cst {dimension_numbers = #tpu.dot_dimension_numbers<[1], [0], [0], [1], [0, 0, 1, 1], [], []>} : vector<128x144xbf16>, vector<144x128xbf16>, vector<128x128xf32> -> vector<128x128xf32>
    %c0_4 = arith.constant 0 : index
    %c0_5 = arith.constant 0 : index
    %6 = vector.load %arg6[%c0_4, %c0_5] : memref<1x128xf32, #tpu.memory_space<vmem>>, vector<1x128xf32>
    %7 = vector.broadcast %6 : vector<1x128xf32> to vector<128x128xf32>
    %8 = arith.addf %5, %7 : vector<128x128xf32>
    %cst_6 = arith.constant 2.000000e-01 : f32
    %9 = vector.broadcast %cst_6 : f32 to vector<128x128xf32>
    %10 = arith.mulf %9, %8 : vector<128x128xf32>
    %11 = arith.maximumf %8, %10 : vector<128x128xf32>
    %c0_7 = arith.constant 0 : index
    %c0_8 = arith.constant 0 : index
    %c0_9 = arith.constant 0 : index
    %12 = vector.load %arg7[%c0_7, %c0_8, %c0_9] : memref<1x128x128xf32, #tpu.memory_space<vmem>>, vector<1x128x128xf32>
    %13 = vector.shape_cast %12 : vector<1x128x128xf32> to vector<128x128xf32>
    %14 = vector.shape_cast %11 : vector<128x128xf32> to vector<1x128x128xf32>
    tpu.vector_store %arg7[%c0_7, %c0_8, %c0_9], %14 {strides = array<i32>} : memref<1x128x128xf32, #tpu.memory_space<vmem>>, vector<1x128x128xf32>,
    return
  }
  func.func @transform_0(%arg0: i32, %arg1: i32, %arg2: i32) -> (i32, i32, i32, i32) {
    %c0_i32 = arith.constant 0 : i32
    %c0_i32_0 = arith.constant 0 : i32
    %c0_i32_1 = arith.constant 0 : i32
    return %arg0, %arg1, %c0_i32, %c0_i32_0 : i32, i32, i32, i32
  }
  func.func @transform_1(%arg0: i32, %arg1: i32, %arg2: i32) -> (i32, i32, i32, i32) {
    %c1_i32 = arith.constant 1 : i32
    %0 = arith.addi %arg1, %c1_i32 : i32
    %c1_i32_0 = arith.constant 1 : i32
    %1 = arith.muli %0, %c1_i32_0 : i32
    %c0_i32 = arith.constant 0 : i32
    %c0_i32_1 = arith.constant 0 : i32
    %c0_i32_2 = arith.constant 0 : i32
    return %arg0, %1, %c0_i32, %c0_i32_1 : i32, i32, i32, i32
  }
  func.func @transform_2(%arg0: i32, %arg1: i32, %arg2: i32) -> (i32, i32) {
    %c0_i32 = arith.constant 0 : i32
    %c0_i32_0 = arith.constant 0 : i32
    return %c0_i32, %arg2 : i32, i32
  }
  func.func @transform_3(%arg0: i32, %arg1: i32, %arg2: i32) -> (i32, i32) {
    %c0_i32 = arith.constant 0 : i32
    %c0_i32_0 = arith.constant 0 : i32
    return %c0_i32, %arg2 : i32, i32
  }
  func.func @transform_4(%arg0: i32, %arg1: i32, %arg2: i32) -> (i32, i32, i32) {
    %c0_i32 = arith.constant 0 : i32
    return %arg0, %arg1, %arg2 : i32, i32, i32
  }
}

</mosaic_0001>

<llo_original>
// kernel: tpu_custom_call.1
$region0: #{tpu_custom_call.1}
  #allocation0 [shape = 'u32[]', space=smem, size = 0x4, offset = 0x4, fixed_abs, tag = 'smem constant byte address 0x4 - core index']
  #allocation1 [shape = 'u32[144,128]{1,0:T(1,128)}', space=vmem, size = 0x12000, scoped, tag = 'internal scratch']
  #allocation2 [shape = 'bf16[128,144]{1,0:T(16,128)(2,1)}', space=vmem, size = 0x10000, scoped, tag = 'scratch operand']
  %s0 = inlined_call_operand.vmem [shape: bf16[2,24,18,16], index: 0, kind: input, shape index: {}]
  %s1 = inlined_call_operand.vmem [shape: bf16[2,24,18,16], index: 1, kind: input, shape index: {}]
  %s2 = inlined_call_operand.vmem [shape: bf16[144,128], index: 2, kind: input, shape index: {}]
  %s3 = inlined_call_operand.vmem [shape: f32[1,128], index: 3, kind: input, shape index: {}]
  %s4 = inlined_call_operand.hbm [shape: f32[2,256,128], index: 4, kind: output, shape index: {}]
  %s5 = sld [smem:[#allocation0]]
  $region53: #{tpu_custom_call.1} parent=0
    _
  %s7 = ssub.s32 1, %s5
  %s8 = scalar_select 0, %s7, %s5
  $region1: #{tpu_custom_call.1} parent=0
    #allocation3 [shape = 'u8[131072]{0}', space=vmem, size = 0x20000, scoped, tag = 'output window, operand 0']
    #allocation4 [shape = 's32[2]{0}', space=sflag, size = 0x8, scoped, tag = 'scoped memory for tpu_custom_call.1']
    %9 = vsyncpa [#allocation4], 0
    %s10 = scalar_lea.sflag [#allocation4], 1
    %11 = vsyncpa %s10, 0
    loop: start=0, step=1, limit=6
    $region2: #{tpu_custom_call.1} parent=1 // loop_pre_header
      _
    $region3: #{tpu_custom_call.1} parent=1 // loop_header
      %s13 = sphi 0, %s17
      %p14 = scmp.ge.s32.totalorder %s13, 6
      %s20 = sphi 0, %s39
      %s21 = sphi 0, %s35
      %s22 = sphi 0, %s31
      %s23 = sphi 0, %s20
      %s24 = sphi 0, %s21
      %s25 = sphi 0, %s22
      %s26 = sphi 0, %s23
      %s27 = sphi 0, %s24
      %s28 = sphi 0, %s25
      %s44 = sphi 0, %s46
      %s47 = sphi 0, %s44
      %s48 = sphi 0, %s47
      %s64 = sphi 0, %s48
      %s74 = sphi 0, %s76
      %s77 = sphi 0, %s74
      %s78 = sphi 0, %s77
      %s94 = sphi 0, %s78
      %s100 = sphi 0, %s102
      %s103 = sphi 0, %s100
      %s104 = sphi 0, %s103
      %s120 = sphi 0, %s104
      %s126 = sphi 0, %s128
      %s129 = sphi 0, %s126
      %s130 = sphi 0, %s129
      %s146 = sphi 0, %s130
      %s156 = sphi 0, %s158
      %s159 = sphi 0, %s156
      %s160 = sphi 0, %s159
      %s176 = sphi 0, %s160
    $region4: #{tpu_custom_call.1} parent=1 // loop_header_branch
      %16 = sbr.rel (%p14) target = $region8
    $region5: #{tpu_custom_call.1} parent=1 // loop_body
      %s18 = ssub.s32 %s13, 1
      %s19 = ssub.s32 %s13, 2
      %s29 = sadd.s32 1, %s22
      %p30 = scmp.ge.s32.totalorder %s29, 1
      %s31 = scalar_select %p30, 0, %s29
      %s32 = sadd.s32 1, %s21
      %s33 = scalar_select %p30, %s32, %s21
      %p34 = scmp.ge.s32.totalorder %s33, 2
      %s35 = scalar_select %p34, 0, %s33
      %s36 = sadd.s32 1, %s20
      %s37 = scalar_select %p34, %s36, %s20
      %p38 = scmp.ge.s32.totalorder %s37, 2
      %s39 = scalar_select %p38, 0, %s37
      %s40 = ssub.s32 %s20, %s39
      %s41 = ssub.s32 %s21, %s35
      %s42 = sor.u32 %s40, %s41
      %p43 = scmp.eq.s32.totalorder %s42, 0
      %s45 = sadd.s32 %s44, 1
      %s46 = scalar_select %p43, %s44, %s45
      %p49 = pneg %p43
      %p50 = scmp.eq.s32.totalorder %s13, 3
      %p51 = por %p49, %p50
      %p52 = scmp.ne.s32.totalorder %s44, %s47
      %p53 = scmp.eq.s32.totalorder %s13, 0
      %p54 = por %p52, %p53
      %p55 = scmp.ne.s32.totalorder %s44, %s47
      %p56 = scmp.eq.s32.totalorder %s18, 3
      %p57 = por %p55, %p56
      %p58 = scmp.ne.s32.totalorder %s47, %s48
      %p59 = scmp.eq.s32.totalorder %s18, 0
      %p60 = por %p58, %p59
      %p61 = scmp.ne.s32.totalorder %s47, %s48
      %p62 = scmp.eq.s32.totalorder %s19, 3
      %p63 = por %p61, %p62
      %p65 = scmp.ne.s32.totalorder %s48, %s64
      %p66 = scmp.eq.s32.totalorder %s19, 0
      %p67 = por %p65, %p66
      %s68 = sadd.s32 %s21, 1
      %s69 = sadd.s32 %s35, 1
      %s70 = ssub.s32 %s20, %s39
      %s71 = ssub.s32 %s68, %s69
      %s72 = sor.u32 %s70, %s71
      %p73 = scmp.eq.s32.totalorder %s72, 0
      %s75 = sadd.s32 %s74, 1
      %s76 = scalar_select %p73, %s74, %s75
      %p79 = pneg %p73
      %p80 = scmp.eq.s32.totalorder %s13, 3
      %p81 = por %p79, %p80
      %p82 = scmp.ne.s32.totalorder %s74, %s77
      %p83 = scmp.eq.s32.totalorder %s13, 0
      %p84 = por %p82, %p83
      %p85 = scmp.ne.s32.totalorder %s74, %s77
      %p86 = scmp.eq.s32.totalorder %s18, 3
      %p87 = por %p85, %p86
      %p88 = scmp.ne.s32.totalorder %s77, %s78
      %p89 = scmp.eq.s32.totalorder %s18, 0
      %p90 = por %p88, %p89
      %p91 = scmp.ne.s32.totalorder %s77, %s78
      %p92 = scmp.eq.s32.totalorder %s19, 3
      %p93 = por %p91, %p92
      %p95 = scmp.ne.s32.totalorder %s78, %s94
      %p96 = scmp.eq.s32.totalorder %s19, 0
      %p97 = por %p95, %p96
      %s98 = ssub.s32 %s22, %s31
      %p99 = scmp.eq.s32.totalorder %s98, 0
      %s101 = sadd.s32 %s100, 1
      %s102 = scalar_select %p99, %s100, %s101
      %p105 = pneg %p99
      %p106 = scmp.eq.s32.totalorder %s13, 3
      %p107 = por %p105, %p106
      %p108 = scmp.ne.s32.totalorder %s100, %s103
      %p109 = scmp.eq.s32.totalorder %s13, 0
      %p110 = por %p108, %p109
      %p111 = scmp.ne.s32.totalorder %s100, %s103
      %p112 = scmp.eq.s32.totalorder %s18, 3
      %p113 = por %p111, %p112
      %p114 = scmp.ne.s32.totalorder %s103, %s104
      %p115 = scmp.eq.s32.totalorder %s18, 0
      %p116 = por %p114, %p115
      %p117 = scmp.ne.s32.totalorder %s103, %s104
      %p118 = scmp.eq.s32.totalorder %s19, 3
      %p119 = por %p117, %p118
      %p121 = scmp.ne.s32.totalorder %s104, %s120
      %p122 = scmp.eq.s32.totalorder %s19, 0
      %p123 = por %p121, %p122
      %s124 = ssub.s32 %s22, %s31
      %p125 = scmp.eq.s32.totalorder %s124, 0
      %s127 = sadd.s32 %s126, 1
      %s128 = scalar_select %p125, %s126, %s127
      %p131 = pneg %p125
      %p132 = scmp.eq.s32.totalorder %s13, 3
      %p133 = por %p131, %p132
      %p134 = scmp.ne.s32.totalorder %s126, %s129
      %p135 = scmp.eq.s32.totalorder %s13, 0
      %p136 = por %p134, %p135
      %p137 = scmp.ne.s32.totalorder %s126, %s129
      %p138 = scmp.eq.s32.totalorder %s18, 3
      %p139 = por %p137, %p138
      %p140 = scmp.ne.s32.totalorder %s129, %s130
      %p141 = scmp.eq.s32.totalorder %s18, 0
      %p142 = por %p140, %p141
      %p143 = scmp.ne.s32.totalorder %s129, %s130
      %p144 = scmp.eq.s32.totalorder %s19, 3
      %p145 = por %p143, %p144
      %p147 = scmp.ne.s32.totalorder %s130, %s146
      %p148 = scmp.eq.s32.totalorder %s19, 0
      %p149 = por %p147, %p148
      %s150 = ssub.s32 %s20, %s39
      %s151 = ssub.s32 %s21, %s35
      %s152 = sor.u32 %s150, %s151
      %s153 = ssub.s32 %s22, %s31
      %s154 = sor.u32 %s152, %s153
      %p155 = scmp.eq.s32.totalorder %s154, 0
      %s157 = sadd.s32 %s156, 1
      %s158 = scalar_select %p155, %s156, %s157
      %p161 = pneg %p155
      %p162 = scmp.eq.s32.totalorder %s13, 3
      %p163 = por %p161, %p162
      %p164 = scmp.ne.s32.totalorder %s156, %s159
      %p165 = scmp.eq.s32.totalorder %s13, 0
      %p166 = por %p164, %p165
      %p167 = scmp.ne.s32.totalorder %s156, %s159
      %p168 = scmp.eq.s32.totalorder %s18, 3
      %p169 = por %p167, %p168
      %p170 = scmp.ne.s32.totalorder %s159, %s160
      %p171 = scmp.eq.s32.totalorder %s18, 0
      %p172 = por %p170, %p171
      %p173 = scmp.ne.s32.totalorder %s159, %s160
      %p174 = scmp.eq.s32.totalorder %s19, 3
      %p175 = por %p173, %p174
      %p177 = scmp.ne.s32.totalorder %s160, %s176
      %p178 = scmp.eq.s32.totalorder %s19, 0
      %p179 = por %p177, %p178
      %p180 = scmp.le.s32.totalorder 1, %s13
      %p181 = scmp.lt.s32.totalorder %s13, 5
      %p182 = pnand %p180, %p181
      %p183 = pneg %p182
      // Predicated region
      $region9: #{tpu_custom_call.1} parent=5 // pred_check
        _
      $region10: #{tpu_custom_call.1} parent=5 // pred_check_branch
        %185 = sbr.rel (%p182) target = $region12
      $region11: #{tpu_custom_call.1} parent=5 // pred_region
        %s186 = ssub.s32 %s13, 1
        // Predicated region
        $region13: #{tpu_custom_call.1} parent=11 // pred_check
          %p187 = pneg %p116
        $region14: #{tpu_custom_call.1} parent=11 // pred_check_branch
          %189 = sbr.rel (%p187) target = $region16
        $region15: #{tpu_custom_call.1} parent=11 // pred_region
          %p190 = scmp.lt.s32.totalorder %s25, 0
          %s191 = scalar_select %p190, %s25, 0
          %s192 = smul.addr %s191, 4
          %s193 = scalar_lea.vmem %s2, %s192
        $region16: #{tpu_custom_call.1} parent=11 // pred_fallthru
          _
        // Predicated region
        $region17: #{tpu_custom_call.1} parent=11 // pred_check
          %p194 = pneg %p142
        $region18: #{tpu_custom_call.1} parent=11 // pred_check_branch
          %196 = sbr.rel (%p194) target = $region20
        $region19: #{tpu_custom_call.1} parent=11 // pred_region
          %p197 = scmp.lt.s32.totalorder %s25, 0
          %s198 = scalar_select %p197, %s25, 0
          %s199 = scalar_lea.vmem %s3, %s198
        $region20: #{tpu_custom_call.1} parent=11 // pred_fallthru
          _
      $region12: #{tpu_custom_call.1} parent=5 // pred_fallthru
        _
      %p200 = scmp.lt.s32.totalorder %s13, 4
      // Predicated region
      $region21: #{tpu_custom_call.1} parent=5 // pred_check
        %p201 = pneg %p200
      $region22: #{tpu_custom_call.1} parent=5 // pred_check_branch
        %203 = sbr.rel (%p201) target = $region24
      $region23: #{tpu_custom_call.1} parent=5 // pred_region
        // Predicated region
        $region25: #{tpu_custom_call.1} parent=23 // pred_check
          %p204 = pneg %p54
        $region26: #{tpu_custom_call.1} parent=23 // pred_check_branch
          %206 = sbr.rel (%p204) target = $region28
        $region27: #{tpu_custom_call.1} parent=23 // pred_region
          %s207 = smul.u32 8, %s21
          %p208 = scmp.lt.s32.totalorder %s20, 1
          %s209 = scalar_select %p208, %s20, 1
          %p210 = scmp.lt.s32.totalorder %s207, 23
          %s211 = scalar_select %p210, %s207, 23
          %s212 = smul.addr %s211, 3
          %s213 = smul.addr %s209, 72
          %s214 = sadd.s32 %s212, %s213
          %s215 = smul.addr %s214, 4
          %s216 = scalar_lea.vmem %s0, %s215
          %s217 = smul.u32 8, %s21
        $region28: #{tpu_custom_call.1} parent=23 // pred_fallthru
          _
        // Predicated region
        $region29: #{tpu_custom_call.1} parent=23 // pred_check
          %p218 = pneg %p84
        $region30: #{tpu_custom_call.1} parent=23 // pred_check_branch
          %220 = sbr.rel (%p218) target = $region32
        $region31: #{tpu_custom_call.1} parent=23 // pred_region
          %s221 = sadd.s32 %s21, 1
          %s222 = smul.u32 8, %s221
          %p223 = scmp.lt.s32.totalorder %s20, 1
          %s224 = scalar_select %p223, %s20, 1
          %p225 = scmp.lt.s32.totalorder %s222, 23
          %s226 = scalar_select %p225, %s222, 23
          %s227 = smul.addr %s226, 3
          %s228 = smul.addr %s224, 72
          %s229 = sadd.s32 %s227, %s228
          %s230 = smul.addr %s229, 4
          %s231 = scalar_lea.vmem %s1, %s230
          %s232 = sadd.s32 %s21, 1
          %s233 = smul.u32 8, %s232
        $region32: #{tpu_custom_call.1} parent=23 // pred_fallthru
          _
      $region24: #{tpu_custom_call.1} parent=5 // pred_fallthru
        _
      %p234 = scmp.le.s32.totalorder 1, %s13
      %p235 = scmp.lt.s32.totalorder %s13, 5
      %p236 = pnand %p234, %p235
      %p237 = pneg %p236
      // Predicated region
      $region33: #{tpu_custom_call.1} parent=5 // pred_check
        _
      $region34: #{tpu_custom_call.1} parent=5 // pred_check_branch
        %239 = sbr.rel (%p236) target = $region36
      $region35: #{tpu_custom_call.1} parent=5 // pred_region
        %s240 = ssub.s32 %s13, 1
        %s241 = smul.u32 8, %s24
        %p242 = scmp.lt.s32.totalorder %s23, 1
        %s243 = scalar_select %p242, %s23, 1
        %p244 = scmp.lt.s32.totalorder %s241, 23
        %s245 = scalar_select %p244, %s241, 23
        %s246 = smul.addr %s245, 3
        %s247 = smul.addr %s243, 72
        %s248 = sadd.s32 %s246, %s247
        %s249 = smul.addr %s248, 4
        %s250 = scalar_lea.vmem %s0, %s249
        %p251 = pneg %p60
        %p252 = pneg %p57
        %s253 = sadd.s32 %s24, 1
        %s254 = smul.u32 8, %s253
        %p255 = scmp.lt.s32.totalorder %s23, 1
        %s256 = scalar_select %p255, %s23, 1
        %p257 = scmp.lt.s32.totalorder %s254, 23
        %s258 = scalar_select %p257, %s254, 23
        %s259 = smul.addr %s258, 3
        %s260 = smul.addr %s256, 72
        %s261 = sadd.s32 %s259, %s260
        %s262 = smul.addr %s261, 4
        %s263 = scalar_lea.vmem %s1, %s262
        %p264 = pneg %p90
        %p265 = pneg %p87
        %p266 = scmp.lt.s32.totalorder %s25, 0
        %s267 = scalar_select %p266, %s25, 0
        %s268 = smul.addr %s267, 4
        %s269 = scalar_lea.vmem %s2, %s268
        %p270 = pneg %p116
        %p271 = pneg %p113
        %p272 = scmp.lt.s32.totalorder %s25, 0
        %s273 = scalar_select %p272, %s25, 0
        %s274 = scalar_lea.vmem %s3, %s273
        %p275 = pneg %p142
        %p276 = pneg %p139
        %p277 = pneg %p172
        %p278 = pneg %p169
        %s279 = sand.u32 %s159, 1
        %s280 = scalar_lea.sflag [#allocation4], %s279
        %s281 = sand.u32 %s159, 1
        %s282 = smul.addr %s281, 128
        %s283 = scalar_lea.vmem [#allocation3], %s282
        %s284 = smul.u32 8, %s24
        %p285 = scmp.lt.s32.totalorder %s23, 1
        %s286 = scalar_select %p285, %s23, 1
        %p287 = scmp.lt.s32.totalorder %s284, 23
        %s288 = scalar_select %p287, %s284, 23
        %s289 = smul.addr %s288, 3
        %s290 = smul.addr %s286, 72
        %s291 = sadd.s32 %s289, %s290
        %s292 = smul.addr %s291, 4
        %s293 = scalar_lea.vmem %s0, %s292
        %s294 = smul.u32 8, %s24
        %s295 = sadd.s32 %s24, 1
        %s296 = smul.u32 8, %s295
        %p297 = scmp.lt.s32.totalorder %s23, 1
        %s298 = scalar_select %p297, %s23, 1
        %p299 = scmp.lt.s32.totalorder %s296, 23
        %s300 = scalar_select %p299, %s296, 23
        %s301 = smul.addr %s300, 3
        %s302 = smul.addr %s298, 72
        %s303 = sadd.s32 %s301, %s302
        %s304 = smul.addr %s303, 4
        %s305 = scalar_lea.vmem %s1, %s304
        %s306 = sadd.s32 %s24, 1
        %s307 = smul.u32 8, %s306
        %p308 = scmp.lt.s32.totalorder %s25, 0
        %s309 = scalar_select %p308, %s25, 0
        %s310 = smul.addr %s309, 4
        %s311 = scalar_lea.vmem %s2, %s310
        %p312 = scmp.lt.s32.totalorder %s25, 0
        %s313 = scalar_select %p312, %s25, 0
        %s314 = scalar_lea.vmem %s3, %s313
        %s315 = smul.u32 16, %s24
        %p317 = scmp.eq.s32.totalorder %s25, 0
        // Predicated region
        $region37: #{tpu_custom_call.1} parent=35 // pred_check
          %p318 = pneg %p317
        $region38: #{tpu_custom_call.1} parent=35 // pred_check_branch
          %320 = sbr.rel (%p318) target = $region40
        $region39: #{tpu_custom_call.1} parent=35 // pred_region
          %v321 = vld [vmem:[%s293] sm:$0xf]
          %v322 = vld [vmem:[%s293 + $0x4] sm:$0xf]
          %v323 = vld [vmem:[%s293 + $0xc] sm:$0xf]
          %v324 = vld [vmem:[%s293 + $0x10] sm:$0xf]
          %v325 = vld [vmem:[%s293 + $0x18] sm:$0xf]
          %v326 = vld [vmem:[%s293 + $0x1c] sm:$0xf]
          %v327 = vld [vmem:[%s293 + $0x24] sm:$0xf]
          %v328 = vld [vmem:[%s293 + $0x28] sm:$0xf]
          %v329 = vld [vmem:[%s293 + $0x30] sm:$0xf]
          %v330 = vld [vmem:[%s293 + $0x34] sm:$0xf]
          %v331 = vld [vmem:[%s293 + $0x3c] sm:$0xf]
          %v332 = vld [vmem:[%s293 + $0x40] sm:$0xf]
          %v333 = vld [vmem:[%s293 + $0x48] sm:$0xf]
          %v334 = vld [vmem:[%s293 + $0x4c] sm:$0xf]
          %v335 = vld [vmem:[%s293 + $0x54] sm:$0xf]
          %v336 = vld [vmem:[%s293 + $0x58] sm:$0xf]
          %v353 = vunpack.c.l.b16 %v321
          %v354 = vunpack.c.l.b16 %v322
          %v355 = vunpack.c.l.b16 %v323
          %v356 = vunpack.c.l.b16 %v324
          %v357 = vunpack.c.l.b16 %v325
          %v358 = vunpack.c.l.b16 %v326
          %v359 = vunpack.c.l.b16 %v327
          %v360 = vunpack.c.l.b16 %v328
          %v361 = vunpack.c.l.b16 %v329
          %v362 = vunpack.c.l.b16 %v330
          %v363 = vunpack.c.l.b16 %v331
          %v364 = vunpack.c.l.b16 %v332
          %v365 = vunpack.c.l.b16 %v333
          %v366 = vunpack.c.l.b16 %v334
          %v367 = vunpack.c.l.b16 %v335
          %v368 = vunpack.c.l.b16 %v336
          %v369 = vpack.c.b16 %v354, %v353
          %v370 = vpack.c.b16 %v356, %v355
          %v371 = vpack.c.b16 %v358, %v357
          %v372 = vpack.c.b16 %v360, %v359
          %v373 = vpack.c.b16 %v362, %v361
          %v374 = vpack.c.b16 %v364, %v363
          %v375 = vpack.c.b16 %v366, %v365
          %v376 = vpack.c.b16 %v368, %v367
          %vm385 = vcmask 130048
          %386 = vst.msk [vmem:[#allocation2] sm:$0xff] %vm385, %v369
          %387 = vst.msk [vmem:[#allocation2 + $0x10] sm:$0xff] %vm385, %v370
          %388 = vst.msk [vmem:[#allocation2 + $0x20] sm:$0xff] %vm385, %v371
          %389 = vst.msk [vmem:[#allocation2 + $0x30] sm:$0xff] %vm385, %v372
          %390 = vst.msk [vmem:[#allocation2 + $0x40] sm:$0xff] %vm385, %v373
          %391 = vst.msk [vmem:[#allocation2 + $0x50] sm:$0xff] %vm385, %v374
          %392 = vst.msk [vmem:[#allocation2 + $0x60] sm:$0xff] %vm385, %v375
          %393 = vst.msk [vmem:[#allocation2 + $0x70] sm:$0xff] %vm385, %v376
          %v394 = vld [vmem:[%s293] sm:$0xf]
          %v395 = vld [vmem:[%s293 + $0x4] sm:$0xf]
          %v396 = vld [vmem:[%s293 + $0x8] sm:$0x1]
          %v397 = vld [vmem:[%s293 + $0xc] sm:$0xf]
          %v398 = vld [vmem:[%s293 + $0x10] sm:$0xf]
          %v399 = vld [vmem:[%s293 + $0x14] sm:$0x1]
          %v400 = vld [vmem:[%s293 + $0x18] sm:$0xf]
          %v401 = vld [vmem:[%s293 + $0x1c] sm:$0xf]
          %v402 = vld [vmem:[%s293 + $0x20] sm:$0x1]
          %v403 = vld [vmem:[%s293 + $0x24] sm:$0xf]
          %v404 = vld [vmem:[%s293 + $0x28] sm:$0xf]
          %v405 = vld [vmem:[%s293 + $0x2c] sm:$0x1]
          %v406 = vld [vmem:[%s293 + $0x30] sm:$0xf]
          %v407 = vld [vmem:[%s293 + $0x34] sm:$0xf]
          %v408 = vld [vmem:[%s293 + $0x38] sm:$0x1]
          %v409 = vld [vmem:[%s293 + $0x3c] sm:$0xf]
          %v410 = vld [vmem:[%s293 + $0x40] sm:$0xf]
          %v411 = vld [vmem:[%s293 + $0x44] sm:$0x1]
          %v412 = vld [vmem:[%s293 + $0x48] sm:$0xf]
          %v413 = vld [vmem:[%s293 + $0x4c] sm:$0xf]
          %v414 = vld [vmem:[%s293 + $0x50] sm:$0x1]
          %v415 = vld [vmem:[%s293 + $0x54] sm:$0xf]
          %v416 = vld [vmem:[%s293 + $0x58] sm:$0xf]
          %v417 = vld [vmem:[%s293 + $0x5c] sm:$0x1]
          %vm418 = vsmask.f32 3328
          %vm419 = vsmask.f32 7440
          %vm420 = vmor %vm418, %vm419
          %v422 = vshrl.u32 %v394, 16
          %v424 = vrot.slane %v422, 4
          %v425 = vshll.u32 %v394, 16
          %v427 = vrot.slane %v425, 5
          %v428 = vor.u32 %v424, %v427
          %v429 = vrot.slane %v428, 4
          %v431 = vshll.u32 %v395, 16
          %v433 = vrot.slane %v431, 5
          %v434 = vsel %vm420, %v429, %v433
          %v435 = vshrl.u32 %v395, 16
          %v437 = vrot.slane %v435, 4
          %v438 = vor.u32 %v437, %v433
          %v439 = vrot.slane %v438, 4
          %v441 = vshll.u32 %v396, 16
          %v443 = vrot.slane %v441, 5
          %v444 = vsel %vm420, %v439, %v443
          %v446 = vshrl.u32 %v397, 16
          %v448 = vrot.slane %v446, 4
          %v449 = vshll.u32 %v397, 16
          %v451 = vrot.slane %v449, 5
          %v452 = vor.u32 %v448, %v451
          %v453 = vrot.slane %v452, 4
          %v455 = vshll.u32 %v398, 16
          %v457 = vrot.slane %v455, 5
          %v458 = vsel %vm420, %v453, %v457
          %v459 = vshrl.u32 %v398, 16
          %v461 = vrot.slane %v459, 4
          %v462 = vor.u32 %v461, %v457
          %v463 = vrot.slane %v462, 4
          %v465 = vshll.u32 %v399, 16
          %v467 = vrot.slane %v465, 5
          %v468 = vsel %vm420, %v463, %v467
          %v470 = vshrl.u32 %v400, 16
          %v472 = vrot.slane %v470, 4
          %v473 = vshll.u32 %v400, 16
          %v475 = vrot.slane %v473, 5
          %v476 = vor.u32 %v472, %v475
          %v477 = vrot.slane %v476, 4
          %v479 = vshll.u32 %v401, 16
          %v481 = vrot.slane %v479, 5
          %v482 = vsel %vm420, %v477, %v481
          %v483 = vshrl.u32 %v401, 16
          %v485 = vrot.slane %v483, 4
          %v486 = vor.u32 %v485, %v481
          %v487 = vrot.slane %v486, 4
          %v489 = vshll.u32 %v402, 16
          %v491 = vrot.slane %v489, 5
          %v492 = vsel %vm420, %v487, %v491
          %v494 = vshrl.u32 %v403, 16
          %v496 = vrot.slane %v494, 4
          %v497 = vshll.u32 %v403, 16
          %v499 = vrot.slane %v497, 5
          %v500 = vor.u32 %v496, %v499
          %v501 = vrot.slane %v500, 4
          %v503 = vshll.u32 %v404, 16
          %v505 = vrot.slane %v503, 5
          %v506 = vsel %vm420, %v501, %v505
          %v507 = vshrl.u32 %v404, 16
          %v509 = vrot.slane %v507, 4
          %v510 = vor.u32 %v509, %v505
          %v511 = vrot.slane %v510, 4
          %v513 = vshll.u32 %v405, 16
          %v515 = vrot.slane %v513, 5
          %v516 = vsel %vm420, %v511, %v515
          %v518 = vshrl.u32 %v406, 16
          %v520 = vrot.slane %v518, 4
          %v521 = vshll.u32 %v406, 16
          %v523 = vrot.slane %v521, 5
          %v524 = vor.u32 %v520, %v523
          %v525 = vrot.slane %v524, 4
          %v527 = vshll.u32 %v407, 16
          %v529 = vrot.slane %v527, 5
          %v530 = vsel %vm420, %v525, %v529
          %v531 = vshrl.u32 %v407, 16
          %v533 = vrot.slane %v531, 4
          %v534 = vor.u32 %v533, %v529
          %v535 = vrot.slane %v534, 4
          %v537 = vshll.u32 %v408, 16
          %v539 = vrot.slane %v537, 5
          %v540 = vsel %vm420, %v535, %v539
          %v542 = vshrl.u32 %v409, 16
          %v544 = vrot.slane %v542, 4
          %v545 = vshll.u32 %v409, 16
          %v547 = vrot.slane %v545, 5
          %v548 = vor.u32 %v544, %v547
          %v549 = vrot.slane %v548, 4
          %v551 = vshll.u32 %v410, 16
          %v553 = vrot.slane %v551, 5
          %v554 = vsel %vm420, %v549, %v553
          %v555 = vshrl.u32 %v410, 16
          %v557 = vrot.slane %v555, 4
          %v558 = vor.u32 %v557, %v553
          %v559 = vrot.slane %v558, 4
          %v561 = vshll.u32 %v411, 16
          %v563 = vrot.slane %v561, 5
          %v564 = vsel %vm420, %v559, %v563
          %v566 = vshrl.u32 %v412, 16
          %v568 = vrot.slane %v566, 4
          %v569 = vshll.u32 %v412, 16
          %v571 = vrot.slane %v569, 5
          %v572 = vor.u32 %v568, %v571
          %v573 = vrot.slane %v572, 4
          %v575 = vshll.u32 %v413, 16
          %v577 = vrot.slane %v575, 5
          %v578 = vsel %vm420, %v573, %v577
          %v579 = vshrl.u32 %v413, 16
          %v581 = vrot.slane %v579, 4
          %v582 = vor.u32 %v581, %v577
          %v583 = vrot.slane %v582, 4
          %v585 = vshll.u32 %v414, 16
          %v587 = vrot.slane %v585, 5
          %v588 = vsel %vm420, %v583, %v587
          %v590 = vshrl.u32 %v415, 16
          %v592 = vrot.slane %v590, 4
          %v593 = vshll.u32 %v415, 16
          %v595 = vrot.slane %v593, 5
          %v596 = vor.u32 %v592, %v595
          %v597 = vrot.slane %v596, 4
          %v599 = vshll.u32 %v416, 16
          %v601 = vrot.slane %v599, 5
          %v602 = vsel %vm420, %v597, %v601
          %v603 = vshrl.u32 %v416, 16
          %v605 = vrot.slane %v603, 4
          %v606 = vor.u32 %v605, %v601
          %v607 = vrot.slane %v606, 4
          %v609 = vshll.u32 %v417, 16
          %v611 = vrot.slane %v609, 5
          %v612 = vsel %vm420, %v607, %v611
          %v613 = vunpack.c.l.b16 %v434
          %v614 = vunpack.c.l.b16 %v444
          %v615 = vunpack.c.l.b16 %v458
          %v616 = vunpack.c.l.b16 %v468
          %v617 = vunpack.c.l.b16 %v482
          %v618 = vunpack.c.l.b16 %v492
          %v619 = vunpack.c.l.b16 %v506
          %v620 = vunpack.c.l.b16 %v516
          %v621 = vunpack.c.l.b16 %v530
          %v622 = vunpack.c.l.b16 %v540
          %v623 = vunpack.c.l.b16 %v554
          %v624 = vunpack.c.l.b16 %v564
          %v625 = vunpack.c.l.b16 %v578
          %v626 = vunpack.c.l.b16 %v588
          %v627 = vunpack.c.l.b16 %v602
          %v628 = vunpack.c.l.b16 %v612
          %v629 = vpack.c.b16 %v614, %v613
          %v630 = vpack.c.b16 %v616, %v615
          %v631 = vpack.c.b16 %v618, %v617
          %v632 = vpack.c.b16 %v620, %v619
          %v633 = vpack.c.b16 %v622, %v621
          %v634 = vpack.c.b16 %v624, %v623
          %v635 = vpack.c.b16 %v626, %v625
          %v636 = vpack.c.b16 %v628, %v627
          %637 = vrot.lane.b32.xlu0 %v629, 16
          %v638 = vpop.permute.xlu0 %637
          %639 = vrot.lane.b32.xlu0 %v630, 16
          %v640 = vpop.permute.xlu0 %639
          %641 = vrot.lane.b32.xlu0 %v631, 16
          %v642 = vpop.permute.xlu0 %641
          %643 = vrot.lane.b32.xlu0 %v632, 16
          %v644 = vpop.permute.xlu0 %643
          %645 = vrot.lane.b32.xlu0 %v633, 16
          %v646 = vpop.permute.xlu0 %645
          %647 = vrot.lane.b32.xlu0 %v634, 16
          %v648 = vpop.permute.xlu0 %647
          %649 = vrot.lane.b32.xlu0 %v635, 16
          %v650 = vpop.permute.xlu0 %649
          %651 = vrot.lane.b32.xlu0 %v636, 16
          %v652 = vpop.permute.xlu0 %651
          %vm661 = vcmask 261248
          %662 = vst.msk [vmem:[#allocation2] sm:$0xff] %vm661, %v638
          %663 = vst.msk [vmem:[#allocation2 + $0x10] sm:$0xff] %vm661, %v640
          %664 = vst.msk [vmem:[#allocation2 + $0x20] sm:$0xff] %vm661, %v642
          %665 = vst.msk [vmem:[#allocation2 + $0x30] sm:$0xff] %vm661, %v644
          %666 = vst.msk [vmem:[#allocation2 + $0x40] sm:$0xff] %vm661, %v646
          %667 = vst.msk [vmem:[#allocation2 + $0x50] sm:$0xff] %vm661, %v648
          %668 = vst.msk [vmem:[#allocation2 + $0x60] sm:$0xff] %vm661, %v650
          %669 = vst.msk [vmem:[#allocation2 + $0x70] sm:$0xff] %vm661, %v652
          %v670 = vld [vmem:[%s293] sm:$0xe]
          %v671 = vld [vmem:[%s293 + $0x4] sm:$0xf]
          %v672 = vld [vmem:[%s293 + $0x8] sm:$0x1]
          %v673 = vld [vmem:[%s293 + $0xc] sm:$0xe]
          %v674 = vld [vmem:[%s293 + $0x10] sm:$0xf]
          %v675 = vld [vmem:[%s293 + $0x14] sm:$0x1]
          %v676 = vld [vmem:[%s293 + $0x18] sm:$0xe]
          %v677 = vld [vmem:[%s293 + $0x1c] sm:$0xf]
          %v678 = vld [vmem:[%s293 + $0x20] sm:$0x1]
          %v679 = vld [vmem:[%s293 + $0x24] sm:$0xe]
          %v680 = vld [vmem:[%s293 + $0x28] sm:$0xf]
          %v681 = vld [vmem:[%s293 + $0x2c] sm:$0x1]
          %v682 = vld [vmem:[%s293 + $0x30] sm:$0xe]
          %v683 = vld [vmem:[%s293 + $0x34] sm:$0xf]
          %v684 = vld [vmem:[%s293 + $0x38] sm:$0x1]
          %v685 = vld [vmem:[%s293 + $0x3c] sm:$0xe]
          %v686 = vld [vmem:[%s293 + $0x40] sm:$0xf]
          %v687 = vld [vmem:[%s293 + $0x44] sm:$0x1]
          %v688 = vld [vmem:[%s293 + $0x48] sm:$0xe]
          %v689 = vld [vmem:[%s293 + $0x4c] sm:$0xf]
          %v690 = vld [vmem:[%s293 + $0x50] sm:$0x1]
          %v691 = vld [vmem:[%s293 + $0x54] sm:$0xe]
          %v692 = vld [vmem:[%s293 + $0x58] sm:$0xf]
          %v693 = vld [vmem:[%s293 + $0x5c] sm:$0x1]
          %vm718 = vcmask 1042432
          %vm719 = vcmask 1046532
          %vm720 = vmor %vm718, %vm719
          %v721 = vrot.slane %v670, 5
          %v722 = vrot.slane %v721, 4
          %v723 = vrot.slane %v671, 5
          %v724 = vsel %vm720, %v722, %v723
          %v725 = vrot.slane %v723, 4
          %v726 = vrot.slane %v672, 5
          %v727 = vsel %vm720, %v725, %v726
          %v728 = vrot.slane %v673, 5
          %v729 = vrot.slane %v728, 4
          %v730 = vrot.slane %v674, 5
          %v731 = vsel %vm720, %v729, %v730
          %v732 = vrot.slane %v730, 4
          %v733 = vrot.slane %v675, 5
          %v734 = vsel %vm720, %v732, %v733
          %v735 = vrot.slane %v676, 5
          %v736 = vrot.slane %v735, 4
          %v737 = vrot.slane %v677, 5
          %v738 = vsel %vm720, %v736, %v737
          %v739 = vrot.slane %v737, 4
          %v740 = vrot.slane %v678, 5
          %v741 = vsel %vm720, %v739, %v740
          %v742 = vrot.slane %v679, 5
          %v743 = vrot.slane %v742, 4
          %v744 = vrot.slane %v680, 5
          %v745 = vsel %vm720, %v743, %v744
          %v746 = vrot.slane %v744, 4
          %v747 = vrot.slane %v681, 5
          %v748 = vsel %vm720, %v746, %v747
          %v749 = vrot.slane %v682, 5
          %v750 = vrot.slane %v749, 4
          %v751 = vrot.slane %v683, 5
          %v752 = vsel %vm720, %v750, %v751
          %v753 = vrot.slane %v751, 4
          %v754 = vrot.slane %v684, 5
          %v755 = vsel %vm720, %v753, %v754
          %v756 = vrot.slane %v685, 5
          %v757 = vrot.slane %v756, 4
          %v758 = vrot.slane %v686, 5
          %v759 = vsel %vm720, %v757, %v758
          %v760 = vrot.slane %v758, 4
          %v761 = vrot.slane %v687, 5
          %v762 = vsel %vm720, %v760, %v761
          %v763 = vrot.slane %v688, 5
          %v764 = vrot.slane %v763, 4
          %v765 = vrot.slane %v689, 5
          %v766 = vsel %vm720, %v764, %v765
          %v767 = vrot.slane %v765, 4
          %v768 = vrot.slane %v690, 5
          %v769 = vsel %vm720, %v767, %v768
          %v770 = vrot.slane %v691, 5
          %v771 = vrot.slane %v770, 4
          %v772 = vrot.slane %v692, 5
          %v773 = vsel %vm720, %v771, %v772
          %v774 = vrot.slane %v772, 4
          %v775 = vrot.slane %v693, 5
          %v776 = vsel %vm720, %v774, %v775
          %v777 = vunpack.c.l.b16 %v724
          %v778 = vunpack.c.l.b16 %v727
          %v779 = vunpack.c.l.b16 %v731
          %v780 = vunpack.c.l.b16 %v734
          %v781 = vunpack.c.l.b16 %v738
          %v782 = vunpack.c.l.b16 %v741
          %v783 = vunpack.c.l.b16 %v745
          %v784 = vunpack.c.l.b16 %v748
          %v785 = vunpack.c.l.b16 %v752
          %v786 = vunpack.c.l.b16 %v755
          %v787 = vunpack.c.l.b16 %v759
          %v788 = vunpack.c.l.b16 %v762
          %v789 = vunpack.c.l.b16 %v766
          %v790 = vunpack.c.l.b16 %v769
          %v791 = vunpack.c.l.b16 %v773
          %v792 = vunpack.c.l.b16 %v776
          %v793 = vpack.c.b16 %v778, %v777
          %v794 = vpack.c.b16 %v780, %v779
          %v795 = vpack.c.b16 %v782, %v781
          %v796 = vpack.c.b16 %v784, %v783
          %v797 = vpack.c.b16 %v786, %v785
          %v798 = vpack.c.b16 %v788, %v787
          %v799 = vpack.c.b16 %v790, %v789
          %v800 = vpack.c.b16 %v792, %v791
          %801 = vrot.lane.b32.xlu0 %v793, 32
          %v802 = vpop.permute.xlu0 %801
          %803 = vrot.lane.b32.xlu0 %v794, 32
          %v804 = vpop.permute.xlu0 %803
          %805 = vrot.lane.b32.xlu0 %v795, 32
          %v806 = vpop.permute.xlu0 %805
          %807 = vrot.lane.b32.xlu0 %v796, 32
          %v808 = vpop.permute.xlu0 %807
          %809 = vrot.lane.b32.xlu0 %v797, 32
          %v810 = vpop.permute.xlu0 %809
          %811 = vrot.lane.b32.xlu0 %v798, 32
          %v812 = vpop.permute.xlu0 %811
          %813 = vrot.lane.b32.xlu0 %v799, 32
          %v814 = vpop.permute.xlu0 %813
          %815 = vrot.lane.b32.xlu0 %v800, 32
          %v816 = vpop.permute.xlu0 %815
          %vm825 = vcmask 392448
          %826 = vst.msk [vmem:[#allocation2] sm:$0xff] %vm825, %v802
          %827 = vst.msk [vmem:[#allocation2 + $0x10] sm:$0xff] %vm825, %v804
          %828 = vst.msk [vmem:[#allocation2 + $0x20] sm:$0xff] %vm825, %v806
          %829 = vst.msk [vmem:[#allocation2 + $0x30] sm:$0xff] %vm825, %v808
          %830 = vst.msk [vmem:[#allocation2 + $0x40] sm:$0xff] %vm825, %v810
          %831 = vst.msk [vmem:[#allocation2 + $0x50] sm:$0xff] %vm825, %v812
          %832 = vst.msk [vmem:[#allocation2 + $0x60] sm:$0xff] %vm825, %v814
          %833 = vst.msk [vmem:[#allocation2 + $0x70] sm:$0xff] %vm825, %v816
          %s834 = scalar_lea.vmem %s293, 12
          %v835 = vld [vmem:[%s834] sm:$0xf]
          %v836 = vld [vmem:[%s834 + $0x4] sm:$0xf]
          %v837 = vld [vmem:[%s834 + $0xc] sm:$0xf]
          %v838 = vld [vmem:[%s834 + $0x10] sm:$0xf]
          %v839 = vld [vmem:[%s834 + $0x18] sm:$0xf]
          %v840 = vld [vmem:[%s834 + $0x1c] sm:$0xf]
          %v841 = vld [vmem:[%s834 + $0x24] sm:$0xf]
          %v842 = vld [vmem:[%s834 + $0x28] sm:$0xf]
          %v843 = vld [vmem:[%s834 + $0x30] sm:$0xf]
          %v844 = vld [vmem:[%s834 + $0x34] sm:$0xf]
          %v845 = vld [vmem:[%s834 + $0x3c] sm:$0xf]
          %v846 = vld [vmem:[%s834 + $0x40] sm:$0xf]
          %v847 = vld [vmem:[%s834 + $0x48] sm:$0xf]
          %v848 = vld [vmem:[%s834 + $0x4c] sm:$0xf]
          %v863 = vunpack.c.l.b16 %v835
          %v864 = vunpack.c.l.b16 %v836
          %v865 = vunpack.c.l.b16 %v837
          %v866 = vunpack.c.l.b16 %v838
          %v867 = vunpack.c.l.b16 %v839
          %v868 = vunpack.c.l.b16 %v840
          %v869 = vunpack.c.l.b16 %v841
          %v870 = vunpack.c.l.b16 %v842
          %v871 = vunpack.c.l.b16 %v843
          %v872 = vunpack.c.l.b16 %v844
          %v873 = vunpack.c.l.b16 %v845
          %v874 = vunpack.c.l.b16 %v846
          %v875 = vunpack.c.l.b16 %v847
          %v876 = vunpack.c.l.b16 %v848
          %v877 = vpack.c.b16 %v864, %v863
          %v878 = vpack.c.b16 %v866, %v865
          %v879 = vpack.c.b16 %v868, %v867
          %v880 = vpack.c.b16 %v870, %v869
          %v881 = vpack.c.b16 %v872, %v871
          %v882 = vpack.c.b16 %v874, %v873
          %v883 = vpack.c.b16 %v876, %v875
          %884 = vrot.lane.b32.xlu0 %v877, 48
          %v885 = vpop.permute.xlu0 %884
          %886 = vrot.lane.b32.xlu0 %v878, 48
          %v887 = vpop.permute.xlu0 %886
          %888 = vrot.lane.b32.xlu0 %v879, 48
          %v889 = vpop.permute.xlu0 %888
          %890 = vrot.lane.b32.xlu0 %v880, 48
          %v891 = vpop.permute.xlu0 %890
          %892 = vrot.lane.b32.xlu0 %v881, 48
          %v893 = vpop.permute.xlu0 %892
          %894 = vrot.lane.b32.xlu0 %v882, 48
          %v895 = vpop.permute.xlu0 %894
          %896 = vrot.lane.b32.xlu0 %v883, 48
          %v897 = vpop.permute.xlu0 %896
          %vm905 = vcmask 523648
          %906 = vst.msk [vmem:[#allocation2] sm:$0xff] %vm905, %v885
          %907 = vst.msk [vmem:[#allocation2 + $0x10] sm:$0xff] %vm905, %v887
          %908 = vst.msk [vmem:[#allocation2 + $0x20] sm:$0xff] %vm905, %v889
          %909 = vst.msk [vmem:[#allocation2 + $0x30] sm:$0xff] %vm905, %v891
          %910 = vst.msk [vmem:[#allocation2 + $0x40] sm:$0xff] %vm905, %v893
          %911 = vst.msk [vmem:[#allocation2 + $0x50] sm:$0xff] %vm905, %v895
          %912 = vst.msk [vmem:[#allocation2 + $0x60] sm:$0xff] %vm905, %v897
          %v913 = vld [vmem:[%s305] sm:$0xf]
          %v914 = vld [vmem:[%s305 + $0x4] sm:$0xf]
          %v917 = vunpack.c.l.b16 %v913
          %v918 = vunpack.c.l.b16 %v914
          %v919 = vpack.c.b16 %v918, %v917
          %920 = vrot.lane.b32.xlu0 %v919, 48
          %v921 = vpop.permute.xlu0 %920
          %923 = vst.msk [vmem:[#allocation2 + $0x70] sm:$0xff] %vm905, %v921
          %v924 = vld [vmem:[%s834] sm:$0xf]
          %v925 = vld [vmem:[%s834 + $0x4] sm:$0xf]
          %v926 = vld [vmem:[%s834 + $0x8] sm:$0x1]
          %v927 = vld [vmem:[%s834 + $0xc] sm:$0xf]
          %v928 = vld [vmem:[%s834 + $0x10] sm:$0xf]
          %v929 = vld [vmem:[%s834 + $0x14] sm:$0x1]
          %v930 = vld [vmem:[%s834 + $0x18] sm:$0xf]
          %v931 = vld [vmem:[%s834 + $0x1c] sm:$0xf]
          %v932 = vld [vmem:[%s834 + $0x20] sm:$0x1]
          %v933 = vld [vmem:[%s834 + $0x24] sm:$0xf]
          %v934 = vld [vmem:[%s834 + $0x28] sm:$0xf]
          %v935 = vld [vmem:[%s834 + $0x2c] sm:$0x1]
          %v936 = vld [vmem:[%s834 + $0x30] sm:$0xf]
          %v937 = vld [vmem:[%s834 + $0x34] sm:$0xf]
          %v938 = vld [vmem:[%s834 + $0x38] sm:$0x1]
          %v939 = vld [vmem:[%s834 + $0x3c] sm:$0xf]
          %v940 = vld [vmem:[%s834 + $0x40] sm:$0xf]
          %v941 = vld [vmem:[%s834 + $0x44] sm:$0x1]
          %v942 = vld [vmem:[%s834 + $0x48] sm:$0xf]
          %v943 = vld [vmem:[%s834 + $0x4c] sm:$0xf]
          %v944 = vld [vmem:[%s834 + $0x50] sm:$0x1]
          %v946 = vshrl.u32 %v924, 16
          %v948 = vrot.slane %v946, 4
          %v949 = vshll.u32 %v924, 16
          %v951 = vrot.slane %v949, 5
          %v952 = vor.u32 %v948, %v951
          %v953 = vrot.slane %v952, 4
          %v955 = vshll.u32 %v925, 16
          %v957 = vrot.slane %v955, 5
          %v958 = vsel %vm420, %v953, %v957
          %v959 = vshrl.u32 %v925, 16
          %v961 = vrot.slane %v959, 4
          %v962 = vor.u32 %v961, %v957
          %v963 = vrot.slane %v962, 4
          %v965 = vshll.u32 %v926, 16
          %v967 = vrot.slane %v965, 5
          %v968 = vsel %vm420, %v963, %v967
          %v970 = vshrl.u32 %v927, 16
          %v972 = vrot.slane %v970, 4
          %v973 = vshll.u32 %v927, 16
          %v975 = vrot.slane %v973, 5
          %v976 = vor.u32 %v972, %v975
          %v977 = vrot.slane %v976, 4
          %v979 = vshll.u32 %v928, 16
          %v981 = vrot.slane %v979, 5
          %v982 = vsel %vm420, %v977, %v981
          %v983 = vshrl.u32 %v928, 16
          %v985 = vrot.slane %v983, 4
          %v986 = vor.u32 %v985, %v981
          %v987 = vrot.slane %v986, 4
          %v989 = vshll.u32 %v929, 16
          %v991 = vrot.slane %v989, 5
          %v992 = vsel %vm420, %v987, %v991
          %v994 = vshrl.u32 %v930, 16
          %v996 = vrot.slane %v994, 4
          %v997 = vshll.u32 %v930, 16
          %v999 = vrot.slane %v997, 5
          %v1000 = vor.u32 %v996, %v999
          %v1001 = vrot.slane %v1000, 4
          %v1003 = vshll.u32 %v931, 16
          %v1005 = vrot.slane %v1003, 5
          %v1006 = vsel %vm420, %v1001, %v1005
          %v1007 = vshrl.u32 %v931, 16
          %v1009 = vrot.slane %v1007, 4
          %v1010 = vor.u32 %v1009, %v1005
          %v1011 = vrot.slane %v1010, 4
          %v1013 = vshll.u32 %v932, 16
          %v1015 = vrot.slane %v1013, 5
          %v1016 = vsel %vm420, %v1011, %v1015
          %v1018 = vshrl.u32 %v933, 16
          %v1020 = vrot.slane %v1018, 4
          %v1021 = vshll.u32 %v933, 16
          %v1023 = vrot.slane %v1021, 5
          %v1024 = vor.u32 %v1020, %v1023
          %v1025 = vrot.slane %v1024, 4
          %v1027 = vshll.u32 %v934, 16
          %v1029 = vrot.slane %v1027, 5
          %v1030 = vsel %vm420, %v1025, %v1029
          %v1031 = vshrl.u32 %v934, 16
          %v1033 = vrot.slane %v1031, 4
          %v1034 = vor.u32 %v1033, %v1029
          %v1035 = vrot.slane %v1034, 4
          %v1037 = vshll.u32 %v935, 16
          %v1039 = vrot.slane %v1037, 5
          %v1040 = vsel %vm420, %v1035, %v1039
          %v1042 = vshrl.u32 %v936, 16
          %v1044 = vrot.slane %v1042, 4
          %v1045 = vshll.u32 %v936, 16
          %v1047 = vrot.slane %v1045, 5
          %v1048 = vor.u32 %v1044, %v1047
          %v1049 = vrot.slane %v1048, 4
          %v1051 = vshll.u32 %v937, 16
          %v1053 = vrot.slane %v1051, 5
          %v1054 = vsel %vm420, %v1049, %v1053
          %v1055 = vshrl.u32 %v937, 16
          %v1057 = vrot.slane %v1055, 4
          %v1058 = vor.u32 %v1057, %v1053
          %v1059 = vrot.slane %v1058, 4
          %v1061 = vshll.u32 %v938, 16
          %v1063 = vrot.slane %v1061, 5
          %v1064 = vsel %vm420, %v1059, %v1063
          %v1066 = vshrl.u32 %v939, 16
          %v1068 = vrot.slane %v1066, 4
          %v1069 = vshll.u32 %v939, 16
          %v1071 = vrot.slane %v1069, 5
          %v1072 = vor.u32 %v1068, %v1071
          %v1073 = vrot.slane %v1072, 4
          %v1075 = vshll.u32 %v940, 16
          %v1077 = vrot.slane %v1075, 5
          %v1078 = vsel %vm420, %v1073, %v1077
          %v1079 = vshrl.u32 %v940, 16
          %v1081 = vrot.slane %v1079, 4
          %v1082 = vor.u32 %v1081, %v1077
          %v1083 = vrot.slane %v1082, 4
          %v1085 = vshll.u32 %v941, 16
          %v1087 = vrot.slane %v1085, 5
          %v1088 = vsel %vm420, %v1083, %v1087
          %v1090 = vshrl.u32 %v942, 16
          %v1092 = vrot.slane %v1090, 4
          %v1093 = vshll.u32 %v942, 16
          %v1095 = vrot.slane %v1093, 5
          %v1096 = vor.u32 %v1092, %v1095
          %v1097 = vrot.slane %v1096, 4
          %v1099 = vshll.u32 %v943, 16
          %v1101 = vrot.slane %v1099, 5
          %v1102 = vsel %vm420, %v1097, %v1101
          %v1103 = vshrl.u32 %v943, 16
          %v1105 = vrot.slane %v1103, 4
          %v1106 = vor.u32 %v1105, %v1101
          %v1107 = vrot.slane %v1106, 4
          %v1109 = vshll.u32 %v944, 16
          %v1111 = vrot.slane %v1109, 5
          %v1112 = vsel %vm420, %v1107, %v1111
          %v1113 = vunpack.c.l.b16 %v958
          %v1114 = vunpack.c.l.b16 %v968
          %v1115 = vunpack.c.l.b16 %v982
          %v1116 = vunpack.c.l.b16 %v992
          %v1117 = vunpack.c.l.b16 %v1006
          %v1118 = vunpack.c.l.b16 %v1016
          %v1119 = vunpack.c.l.b16 %v1030
          %v1120 = vunpack.c.l.b16 %v1040
          %v1121 = vunpack.c.l.b16 %v1054
          %v1122 = vunpack.c.l.b16 %v1064
          %v1123 = vunpack.c.l.b16 %v1078
          %v1124 = vunpack.c.l.b16 %v1088
          %v1125 = vunpack.c.l.b16 %v1102
          %v1126 = vunpack.c.l.b16 %v1112
          %v1127 = vpack.c.b16 %v1114, %v1113
          %v1128 = vpack.c.b16 %v1116, %v1115
          %v1129 = vpack.c.b16 %v1118, %v1117
          %v1130 = vpack.c.b16 %v1120, %v1119
          %v1131 = vpack.c.b16 %v1122, %v1121
          %v1132 = vpack.c.b16 %v1124, %v1123
          %v1133 = vpack.c.b16 %v1126, %v1125
          %1134 = vrot.lane.b32.xlu0 %v1127, 64
          %v1135 = vpop.permute.xlu0 %1134
          %1136 = vrot.lane.b32.xlu0 %v1128, 64
          %v1137 = vpop.permute.xlu0 %1136
          %1138 = vrot.lane.b32.xlu0 %v1129, 64
          %v1139 = vpop.permute.xlu0 %1138
          %1140 = vrot.lane.b32.xlu0 %v1130, 64
          %v1141 = vpop.permute.xlu0 %1140
          %1142 = vrot.lane.b32.xlu0 %v1131, 64
          %v1143 = vpop.permute.xlu0 %1142
          %1144 = vrot.lane.b32.xlu0 %v1132, 64
          %v1145 = vpop.permute.xlu0 %1144
          %1146 = vrot.lane.b32.xlu0 %v1133, 64
          %v1147 = vpop.permute.xlu0 %1146
          %vm1155 = vcmask 654848
          %1156 = vst.msk [vmem:[#allocation2] sm:$0xff] %vm1155, %v1135
          %1157 = vst.msk [vmem:[#allocation2 + $0x10] sm:$0xff] %vm1155, %v1137
          %1158 = vst.msk [vmem:[#allocation2 + $0x20] sm:$0xff] %vm1155, %v1139
          %1159 = vst.msk [vmem:[#allocation2 + $0x30] sm:$0xff] %vm1155, %v1141
          %1160 = vst.msk [vmem:[#allocation2 + $0x40] sm:$0xff] %vm1155, %v1143
          %1161 = vst.msk [vmem:[#allocation2 + $0x50] sm:$0xff] %vm1155, %v1145
          %1162 = vst.msk [vmem:[#allocation2 + $0x60] sm:$0xff] %vm1155, %v1147
          %v1163 = vld [vmem:[%s305] sm:$0xf]
          %v1164 = vld [vmem:[%s305 + $0x4] sm:$0xf]
          %v1165 = vld [vmem:[%s305 + $0x8] sm:$0x1]
          %v1169 = vunpack.c.l.b16 %v1163
          %v1170 = vunpack.c.l.b16 %v1164
          %v1171 = vunpack.c.l.b16 %v1165
          %v1172 = vpack.c.b16 %v1170, %v1169
          %v1173 = vpack.c.b16 %v1171, %v1171
          %vm1174 = vsmask.f32 7424
          %v1176 = vshrl.u32 %v1172, 16
          %v1178 = vshll.u32 %v1172, 16
          %v1180 = vrot.slane %v1178, 1
          %v1181 = vor.u32 %v1176, %v1180
          %v1183 = vshll.u32 %v1173, 16
          %v1185 = vrot.slane %v1183, 1
          %v1186 = vsel %vm1174, %v1181, %v1185
          %1187 = vrot.lane.b32.xlu0 %v1186, 64
          %v1188 = vpop.permute.xlu0 %1187
          %1190 = vst.msk [vmem:[#allocation2 + $0x70] sm:$0xff] %vm1155, %v1188
          %v1191 = vld [vmem:[%s834] sm:$0xe]
          %v1192 = vld [vmem:[%s834 + $0x4] sm:$0xf]
          %v1193 = vld [vmem:[%s834 + $0x8] sm:$0x1]
          %v1194 = vld [vmem:[%s834 + $0xc] sm:$0xe]
          %v1195 = vld [vmem:[%s834 + $0x10] sm:$0xf]
          %v1196 = vld [vmem:[%s834 + $0x14] sm:$0x1]
          %v1197 = vld [vmem:[%s834 + $0x18] sm:$0xe]
          %v1198 = vld [vmem:[%s834 + $0x1c] sm:$0xf]
          %v1199 = vld [vmem:[%s834 + $0x20] sm:$0x1]
          %v1200 = vld [vmem:[%s834 + $0x24] sm:$0xe]
          %v1201 = vld [vmem:[%s834 + $0x28] sm:$0xf]
          %v1202 = vld [vmem:[%s834 + $0x2c] sm:$0x1]
          %v1203 = vld [vmem:[%s834 + $0x30] sm:$0xe]
          %v1204 = vld [vmem:[%s834 + $0x34] sm:$0xf]
          %v1205 = vld [vmem:[%s834 + $0x38] sm:$0x1]
          %v1206 = vld [vmem:[%s834 + $0x3c] sm:$0xe]
          %v1207 = vld [vmem:[%s834 + $0x40] sm:$0xf]
          %v1208 = vld [vmem:[%s834 + $0x44] sm:$0x1]
          %v1209 = vld [vmem:[%s834 + $0x48] sm:$0xe]
          %v1210 = vld [vmem:[%s834 + $0x4c] sm:$0xf]
          %v1211 = vld [vmem:[%s834 + $0x50] sm:$0x1]
          %v1233 = vrot.slane %v1191, 5
          %v1234 = vrot.slane %v1233, 4
          %v1235 = vrot.slane %v1192, 5
          %v1236 = vsel %vm720, %v1234, %v1235
          %v1237 = vrot.slane %v1235, 4
          %v1238 = vrot.slane %v1193, 5
          %v1239 = vsel %vm720, %v1237, %v1238
          %v1240 = vrot.slane %v1194, 5
          %v1241 = vrot.slane %v1240, 4
          %v1242 = vrot.slane %v1195, 5
          %v1243 = vsel %vm720, %v1241, %v1242
          %v1244 = vrot.slane %v1242, 4
          %v1245 = vrot.slane %v1196, 5
          %v1246 = vsel %vm720, %v1244, %v1245
          %v1247 = vrot.slane %v1197, 5
          %v1248 = vrot.slane %v1247, 4
          %v1249 = vrot.slane %v1198, 5
          %v1250 = vsel %vm720, %v1248, %v1249
          %v1251 = vrot.slane %v1249, 4
          %v1252 = vrot.slane %v1199, 5
          %v1253 = vsel %vm720, %v1251, %v1252
          %v1254 = vrot.slane %v1200, 5
          %v1255 = vrot.slane %v1254, 4
          %v1256 = vrot.slane %v1201, 5
          %v1257 = vsel %vm720, %v1255, %v1256
          %v1258 = vrot.slane %v1256, 4
          %v1259 = vrot.slane %v1202, 5
          %v1260 = vsel %vm720, %v1258, %v1259
          %v1261 = vrot.slane %v1203, 5
          %v1262 = vrot.slane %v1261, 4
          %v1263 = vrot.slane %v1204, 5
          %v1264 = vsel %vm720, %v1262, %v1263
          %v1265 = vrot.slane %v1263, 4
          %v1266 = vrot.slane %v1205, 5
          %v1267 = vsel %vm720, %v1265, %v1266
          %v1268 = vrot.slane %v1206, 5
          %v1269 = vrot.slane %v1268, 4
          %v1270 = vrot.slane %v1207, 5
          %v1271 = vsel %vm720, %v1269, %v1270
          %v1272 = vrot.slane %v1270, 4
          %v1273 = vrot.slane %v1208, 5
          %v1274 = vsel %vm720, %v1272, %v1273
          %v1275 = vrot.slane %v1209, 5
          %v1276 = vrot.slane %v1275, 4
          %v1277 = vrot.slane %v1210, 5
          %v1278 = vsel %vm720, %v1276, %v1277
          %v1279 = vrot.slane %v1277, 4
          %v1280 = vrot.slane %v1211, 5
          %v1281 = vsel %vm720, %v1279, %v1280
          %v1282 = vunpack.c.l.b16 %v1236
          %v1283 = vunpack.c.l.b16 %v1239
          %v1284 = vunpack.c.l.b16 %v1243
          %v1285 = vunpack.c.l.b16 %v1246
          %v1286 = vunpack.c.l.b16 %v1250
          %v1287 = vunpack.c.l.b16 %v1253
          %v1288 = vunpack.c.l.b16 %v1257
          %v1289 = vunpack.c.l.b16 %v1260
          %v1290 = vunpack.c.l.b16 %v1264
          %v1291 = vunpack.c.l.b16 %v1267
          %v1292 = vunpack.c.l.b16 %v1271
          %v1293 = vunpack.c.l.b16 %v1274
          %v1294 = vunpack.c.l.b16 %v1278
          %v1295 = vunpack.c.l.b16 %v1281
          %v1296 = vpack.c.b16 %v1283, %v1282
          %v1297 = vpack.c.b16 %v1285, %v1284
          %v1298 = vpack.c.b16 %v1287, %v1286
          %v1299 = vpack.c.b16 %v1289, %v1288
          %v1300 = vpack.c.b16 %v1291, %v1290
          %v1301 = vpack.c.b16 %v1293, %v1292
          %v1302 = vpack.c.b16 %v1295, %v1294
          %1303 = vrot.lane.b32.xlu0 %v1296, 80
          %v1304 = vpop.permute.xlu0 %1303
          %1305 = vrot.lane.b32.xlu0 %v1297, 80
          %v1306 = vpop.permute.xlu0 %1305
          %1307 = vrot.lane.b32.xlu0 %v1298, 80
          %v1308 = vpop.permute.xlu0 %1307
          %1309 = vrot.lane.b32.xlu0 %v1299, 80
          %v1310 = vpop.permute.xlu0 %1309
          %1311 = vrot.lane.b32.xlu0 %v1300, 80
          %v1312 = vpop.permute.xlu0 %1311
          %1313 = vrot.lane.b32.xlu0 %v1301, 80
          %v1314 = vpop.permute.xlu0 %1313
          %1315 = vrot.lane.b32.xlu0 %v1302, 80
          %v1316 = vpop.permute.xlu0 %1315
          %vm1324 = vcmask 786048
          %1325 = vst.msk [vmem:[#allocation2] sm:$0xff] %vm1324, %v1304
          %1326 = vst.msk [vmem:[#allocation2 + $0x10] sm:$0xff] %vm1324, %v1306
          %1327 = vst.msk [vmem:[#allocation2 + $0x20] sm:$0xff] %vm1324, %v1308
          %1328 = vst.msk [vmem:[#allocation2 + $0x30] sm:$0xff] %vm1324, %v1310
          %1329 = vst.msk [vmem:[#allocation2 + $0x40] sm:$0xff] %vm1324, %v1312
          %1330 = vst.msk [vmem:[#allocation2 + $0x50] sm:$0xff] %vm1324, %v1314
          %1331 = vst.msk [vmem:[#allocation2 + $0x60] sm:$0xff] %vm1324, %v1316
          %v1332 = vld [vmem:[%s305] sm:$0xe]
          %v1333 = vld [vmem:[%s305 + $0x4] sm:$0xf]
          %v1334 = vld [vmem:[%s305 + $0x8] sm:$0x1]
          %v1338 = vunpack.c.l.b16 %v1332
          %v1339 = vunpack.c.l.b16 %v1333
          %v1340 = vunpack.c.l.b16 %v1334
          %v1341 = vpack.c.b16 %v1339, %v1338
          %v1342 = vpack.c.b16 %v1340, %v1340
          %vm1343 = vcmask 1046528
          %v1344 = vrot.slane %v1341, 1
          %v1345 = vrot.slane %v1342, 1
          %v1346 = vsel %vm1343, %v1344, %v1345
          %1347 = vrot.lane.b32.xlu0 %v1346, 80
          %v1348 = vpop.permute.xlu0 %1347
          %1350 = vst.msk [vmem:[#allocation2 + $0x70] sm:$0xff] %vm1324, %v1348
          %s1351 = scalar_lea.vmem %s293, 24
          %v1352 = vld [vmem:[%s1351] sm:$0xf]
          %v1353 = vld [vmem:[%s1351 + $0x4] sm:$0xf]
          %v1354 = vld [vmem:[%s1351 + $0xc] sm:$0xf]
          %v1355 = vld [vmem:[%s1351 + $0x10] sm:$0xf]
          %v1356 = vld [vmem:[%s1351 + $0x18] sm:$0xf]
          %v1357 = vld [vmem:[%s1351 + $0x1c] sm:$0xf]
          %v1358 = vld [vmem:[%s1351 + $0x24] sm:$0xf]
          %v1359 = vld [vmem:[%s1351 + $0x28] sm:$0xf]
          %v1360 = vld [vmem:[%s1351 + $0x30] sm:$0xf]
          %v1361 = vld [vmem:[%s1351 + $0x34] sm:$0xf]
          %v1362 = vld [vmem:[%s1351 + $0x3c] sm:$0xf]
          %v1363 = vld [vmem:[%s1351 + $0x40] sm:$0xf]
          %v1376 = vunpack.c.l.b16 %v1352
          %v1377 = vunpack.c.l.b16 %v1353
          %v1378 = vunpack.c.l.b16 %v1354
          %v1379 = vunpack.c.l.b16 %v1355
          %v1380 = vunpack.c.l.b16 %v1356
          %v1381 = vunpack.c.l.b16 %v1357
          %v1382 = vunpack.c.l.b16 %v1358
          %v1383 = vunpack.c.l.b16 %v1359
          %v1384 = vunpack.c.l.b16 %v1360
          %v1385 = vunpack.c.l.b16 %v1361
          %v1386 = vunpack.c.l.b16 %v1362
          %v1387 = vunpack.c.l.b16 %v1363
          %v1388 = vpack.c.b16 %v1377, %v1376
          %v1389 = vpack.c.b16 %v1379, %v1378
          %v1390 = vpack.c.b16 %v1381, %v1380
          %v1391 = vpack.c.b16 %v1383, %v1382
          %v1392 = vpack.c.b16 %v1385, %v1384
          %v1393 = vpack.c.b16 %v1387, %v1386
          %1394 = vrot.lane.b32.xlu0 %v1388, 96
          %v1395 = vpop.permute.xlu0 %1394
          %1396 = vrot.lane.b32.xlu0 %v1389, 96
          %v1397 = vpop.permute.xlu0 %1396
          %1398 = vrot.lane.b32.xlu0 %v1390, 96
          %v1399 = vpop.permute.xlu0 %1398
          %1400 = vrot.lane.b32.xlu0 %v1391, 96
          %v1401 = vpop.permute.xlu0 %1400
          %1402 = vrot.lane.b32.xlu0 %v1392, 96
          %v1403 = vpop.permute.xlu0 %1402
          %1404 = vrot.lane.b32.xlu0 %v1393, 96
          %v1405 = vpop.permute.xlu0 %1404
          %vm1412 = vcmask 917248
          %1413 = vst.msk [vmem:[#allocation2] sm:$0xff] %vm1412, %v1395
          %1414 = vst.msk [vmem:[#allocation2 + $0x10] sm:$0xff] %vm1412, %v1397
          %1415 = vst.msk [vmem:[#allocation2 + $0x20] sm:$0xff] %vm1412, %v1399
          %1416 = vst.msk [vmem:[#allocation2 + $0x30] sm:$0xff] %vm1412, %v1401
          %1417 = vst.msk [vmem:[#allocation2 + $0x40] sm:$0xff] %vm1412, %v1403
          %1418 = vst.msk [vmem:[#allocation2 + $0x50] sm:$0xff] %vm1412, %v1405
          %v1419 = vld [vmem:[%s305] sm:$0xf]
          %v1420 = vld [vmem:[%s305 + $0x4] sm:$0xf]
          %v1421 = vld [vmem:[%s305 + $0xc] sm:$0xf]
          %v1422 = vld [vmem:[%s305 + $0x10] sm:$0xf]
          %v1427 = vunpack.c.l.b16 %v1419
          %v1428 = vunpack.c.l.b16 %v1420
          %v1429 = vunpack.c.l.b16 %v1421
          %v1430 = vunpack.c.l.b16 %v1422
          %v1431 = vpack.c.b16 %v1428, %v1427
          %v1432 = vpack.c.b16 %v1430, %v1429
          %1433 = vrot.lane.b32.xlu0 %v1431, 96
          %v1434 = vpop.permute.xlu0 %1433
          %1435 = vrot.lane.b32.xlu0 %v1432, 96
          %v1436 = vpop.permute.xlu0 %1435
          %1439 = vst.msk [vmem:[#allocation2 + $0x60] sm:$0xff] %vm1412, %v1434
          %1440 = vst.msk [vmem:[#allocation2 + $0x70] sm:$0xff] %vm1412, %v1436
          %v1441 = vld [vmem:[%s1351] sm:$0xf]
          %v1442 = vld [vmem:[%s1351 + $0x4] sm:$0xf]
          %v1443 = vld [vmem:[%s1351 + $0x8] sm:$0x1]
          %v1444 = vld [vmem:[%s1351 + $0xc] sm:$0xf]
          %v1445 = vld [vmem:[%s1351 + $0x10] sm:$0xf]
          %v1446 = vld [vmem:[%s1351 + $0x14] sm:$0x1]
          %v1447 = vld [vmem:[%s1351 + $0x18] sm:$0xf]
          %v1448 = vld [vmem:[%s1351 + $0x1c] sm:$0xf]
          %v1449 = vld [vmem:[%s1351 + $0x20] sm:$0x1]
          %v1450 = vld [vmem:[%s1351 + $0x24] sm:$0xf]
          %v1451 = vld [vmem:[%s1351 + $0x28] sm:$0xf]
          %v1452 = vld [vmem:[%s1351 + $0x2c] sm:$0x1]
          %v1453 = vld [vmem:[%s1351 + $0x30] sm:$0xf]
          %v1454 = vld [vmem:[%s1351 + $0x34] sm:$0xf]
          %v1455 = vld [vmem:[%s1351 + $0x38] sm:$0x1]
          %v1456 = vld [vmem:[%s1351 + $0x3c] sm:$0xf]
          %v1457 = vld [vmem:[%s1351 + $0x40] sm:$0xf]
          %v1458 = vld [vmem:[%s1351 + $0x44] sm:$0x1]
          %v1460 = vshrl.u32 %v1441, 16
          %v1462 = vrot.slane %v1460, 4
          %v1463 = vshll.u32 %v1441, 16
          %v1465 = vrot.slane %v1463, 5
          %v1466 = vor.u32 %v1462, %v1465
          %v1467 = vrot.slane %v1466, 4
          %v1469 = vshll.u32 %v1442, 16
          %v1471 = vrot.slane %v1469, 5
          %v1472 = vsel %vm420, %v1467, %v1471
          %v1473 = vshrl.u32 %v1442, 16
          %v1475 = vrot.slane %v1473, 4
          %v1476 = vor.u32 %v1475, %v1471
          %v1477 = vrot.slane %v1476, 4
          %v1479 = vshll.u32 %v1443, 16
          %v1481 = vrot.slane %v1479, 5
          %v1482 = vsel %vm420, %v1477, %v1481
          %v1484 = vshrl.u32 %v1444, 16
          %v1486 = vrot.slane %v1484, 4
          %v1487 = vshll.u32 %v1444, 16
          %v1489 = vrot.slane %v1487, 5
          %v1490 = vor.u32 %v1486, %v1489
          %v1491 = vrot.slane %v1490, 4
          %v1493 = vshll.u32 %v1445, 16
          %v1495 = vrot.slane %v1493, 5
          %v1496 = vsel %vm420, %v1491, %v1495
          %v1497 = vshrl.u32 %v1445, 16
          %v1499 = vrot.slane %v1497, 4
          %v1500 = vor.u32 %v1499, %v1495
          %v1501 = vrot.slane %v1500, 4
          %v1503 = vshll.u32 %v1446, 16
          %v1505 = vrot.slane %v1503, 5
          %v1506 = vsel %vm420, %v1501, %v1505
          %v1508 = vshrl.u32 %v1447, 16
          %v1510 = vrot.slane %v1508, 4
          %v1511 = vshll.u32 %v1447, 16
          %v1513 = vrot.slane %v1511, 5
          %v1514 = vor.u32 %v1510, %v1513
          %v1515 = vrot.slane %v1514, 4
          %v1517 = vshll.u32 %v1448, 16
          %v1519 = vrot.slane %v1517, 5
          %v1520 = vsel %vm420, %v1515, %v1519
          %v1521 = vshrl.u32 %v1448, 16
          %v1523 = vrot.slane %v1521, 4
          %v1524 = vor.u32 %v1523, %v1519
          %v1525 = vrot.slane %v1524, 4
          %v1527 = vshll.u32 %v1449, 16
          %v1529 = vrot.slane %v1527, 5
          %v1530 = vsel %vm420, %v1525, %v1529
          %v1532 = vshrl.u32 %v1450, 16
          %v1534 = vrot.slane %v1532, 4
          %v1535 = vshll.u32 %v1450, 16
          %v1537 = vrot.slane %v1535, 5
          %v1538 = vor.u32 %v1534, %v1537
          %v1539 = vrot.slane %v1538, 4
          %v1541 = vshll.u32 %v1451, 16
          %v1543 = vrot.slane %v1541, 5
          %v1544 = vsel %vm420, %v1539, %v1543
          %v1545 = vshrl.u32 %v1451, 16
          %v1547 = vrot.slane %v1545, 4
          %v1548 = vor.u32 %v1547, %v1543
          %v1549 = vrot.slane %v1548, 4
          %v1551 = vshll.u32 %v1452, 16
          %v1553 = vrot.slane %v1551, 5
          %v1554 = vsel %vm420, %v1549, %v1553
          %v1556 = vshrl.u32 %v1453, 16
          %v1558 = vrot.slane %v1556, 4
          %v1559 = vshll.u32 %v1453, 16
          %v1561 = vrot.slane %v1559, 5
          %v1562 = vor.u32 %v1558, %v1561
          %v1563 = vrot.slane %v1562, 4
          %v1565 = vshll.u32 %v1454, 16
          %v1567 = vrot.slane %v1565, 5
          %v1568 = vsel %vm420, %v1563, %v1567
          %v1569 = vshrl.u32 %v1454, 16
          %v1571 = vrot.slane %v1569, 4
          %v1572 = vor.u32 %v1571, %v1567
          %v1573 = vrot.slane %v1572, 4
          %v1575 = vshll.u32 %v1455, 16
          %v1577 = vrot.slane %v1575, 5
          %v1578 = vsel %vm420, %v1573, %v1577
          %v1580 = vshrl.u32 %v1456, 16
          %v1582 = vrot.slane %v1580, 4
          %v1583 = vshll.u32 %v1456, 16
          %v1585 = vrot.slane %v1583, 5
          %v1586 = vor.u32 %v1582, %v1585
          %v1587 = vrot.slane %v1586, 4
          %v1589 = vshll.u32 %v1457, 16
          %v1591 = vrot.slane %v1589, 5
          %v1592 = vsel %vm420, %v1587, %v1591
          %v1593 = vshrl.u32 %v1457, 16
          %v1595 = vrot.slane %v1593, 4
          %v1596 = vor.u32 %v1595, %v1591
          %v1597 = vrot.slane %v1596, 4
          %v1599 = vshll.u32 %v1458, 16
          %v1601 = vrot.slane %v1599, 5
          %v1602 = vsel %vm420, %v1597, %v1601
          %v1603 = vunpack.c.l.b16 %v1472
          %v1604 = vunpack.c.l.b16 %v1482
          %v1605 = vunpack.c.l.b16 %v1496
          %v1606 = vunpack.c.l.b16 %v1506
          %v1607 = vunpack.c.l.b16 %v1520
          %v1608 = vunpack.c.l.b16 %v1530
          %v1609 = vunpack.c.l.b16 %v1544
          %v1610 = vunpack.c.l.b16 %v1554
          %v1611 = vunpack.c.l.b16 %v1568
          %v1612 = vunpack.c.l.b16 %v1578
          %v1613 = vunpack.c.l.b16 %v1592
          %v1614 = vunpack.c.l.b16 %v1602
          %v1615 = vpack.c.b16 %v1604, %v1603
          %v1616 = vpack.c.b16 %v1606, %v1605
          %v1617 = vpack.c.b16 %v1608, %v1607
          %v1618 = vpack.c.b16 %v1610, %v1609
          %v1619 = vpack.c.b16 %v1612, %v1611
          %v1620 = vpack.c.b16 %v1614, %v1613
          %1621 = vrot.lane.b32.xlu0 %v1615, 112
          %v1622 = vpop.permute.xlu0 %1621
          %1623 = vrot.lane.b32.xlu0 %v1616, 112
          %v1624 = vpop.permute.xlu0 %1623
          %1625 = vrot.lane.b32.xlu0 %v1617, 112
          %v1626 = vpop.permute.xlu0 %1625
          %1627 = vrot.lane.b32.xlu0 %v1618, 112
          %v1628 = vpop.permute.xlu0 %1627
          %1629 = vrot.lane.b32.xlu0 %v1619, 112
          %v1630 = vpop.permute.xlu0 %1629
          %1631 = vrot.lane.b32.xlu0 %v1620, 112
          %v1632 = vpop.permute.xlu0 %1631
          %vm1639 = vcmask 1048448
          %1640 = vst.msk [vmem:[#allocation2] sm:$0xff] %vm1639, %v1622
          %1641 = vst.msk [vmem:[#allocation2 + $0x10] sm:$0xff] %vm1639, %v1624
          %1642 = vst.msk [vmem:[#allocation2 + $0x20] sm:$0xff] %vm1639, %v1626
          %1643 = vst.msk [vmem:[#allocation2 + $0x30] sm:$0xff] %vm1639, %v1628
          %1644 = vst.msk [vmem:[#allocation2 + $0x40] sm:$0xff] %vm1639, %v1630
          %1645 = vst.msk [vmem:[#allocation2 + $0x50] sm:$0xff] %vm1639, %v1632
          %v1646 = vld [vmem:[%s305] sm:$0xf]
          %v1647 = vld [vmem:[%s305 + $0x4] sm:$0xf]
          %v1648 = vld [vmem:[%s305 + $0x8] sm:$0x1]
          %v1649 = vld [vmem:[%s305 + $0xc] sm:$0xf]
          %v1650 = vld [vmem:[%s305 + $0x10] sm:$0xf]
          %v1651 = vld [vmem:[%s305 + $0x14] sm:$0x1]
          %v1653 = vshrl.u32 %v1646, 16
          %v1655 = vrot.slane %v1653, 4
          %v1656 = vshll.u32 %v1646, 16
          %v1658 = vrot.slane %v1656, 5
          %v1659 = vor.u32 %v1655, %v1658
          %v1660 = vrot.slane %v1659, 4
          %v1662 = vshll.u32 %v1647, 16
          %v1664 = vrot.slane %v1662, 5
          %v1665 = vsel %vm420, %v1660, %v1664
          %v1666 = vshrl.u32 %v1647, 16
          %v1668 = vrot.slane %v1666, 4
          %v1669 = vor.u32 %v1668, %v1664
          %v1670 = vrot.slane %v1669, 4
          %v1672 = vshll.u32 %v1648, 16
          %v1674 = vrot.slane %v1672, 5
          %v1675 = vsel %vm420, %v1670, %v1674
          %v1677 = vshrl.u32 %v1649, 16
          %v1679 = vrot.slane %v1677, 4
          %v1680 = vshll.u32 %v1649, 16
          %v1682 = vrot.slane %v1680, 5
          %v1683 = vor.u32 %v1679, %v1682
          %v1684 = vrot.slane %v1683, 4
          %v1686 = vshll.u32 %v1650, 16
          %v1688 = vrot.slane %v1686, 5
          %v1689 = vsel %vm420, %v1684, %v1688
          %v1690 = vshrl.u32 %v1650, 16
          %v1692 = vrot.slane %v1690, 4
          %v1693 = vor.u32 %v1692, %v1688
          %v1694 = vrot.slane %v1693, 4
          %v1696 = vshll.u32 %v1651, 16
          %v1698 = vrot.slane %v1696, 5
          %v1699 = vsel %vm420, %v1694, %v1698
          %v1700 = vunpack.c.l.b16 %v1665
          %v1701 = vunpack.c.l.b16 %v1675
          %v1702 = vunpack.c.l.b16 %v1689
          %v1703 = vunpack.c.l.b16 %v1699
          %v1704 = vpack.c.b16 %v1701, %v1700
          %v1705 = vpack.c.b16 %v1703, %v1702
          %1706 = vrot.lane.b32.xlu0 %v1704, 112
          %v1707 = vpop.permute.xlu0 %1706
          %1708 = vrot.lane.b32.xlu0 %v1705, 112
          %v1709 = vpop.permute.xlu0 %1708
          %1712 = vst.msk [vmem:[#allocation2 + $0x60] sm:$0xff] %vm1639, %v1707
          %1713 = vst.msk [vmem:[#allocation2 + $0x70] sm:$0xff] %vm1639, %v1709
          %v1714 = vld [vmem:[%s1351] sm:$0xe]
          %v1715 = vld [vmem:[%s1351 + $0x4] sm:$0xf]
          %v1716 = vld [vmem:[%s1351 + $0x8] sm:$0x1]
          %v1717 = vld [vmem:[%s1351 + $0xc] sm:$0xe]
          %v1718 = vld [vmem:[%s1351 + $0x10] sm:$0xf]
          %v1719 = vld [vmem:[%s1351 + $0x14] sm:$0x1]
          %v1720 = vld [vmem:[%s1351 + $0x18] sm:$0xe]
          %v1721 = vld [vmem:[%s1351 + $0x1c] sm:$0xf]
          %v1722 = vld [vmem:[%s1351 + $0x20] sm:$0x1]
          %v1723 = vld [vmem:[%s1351 + $0x24] sm:$0xe]
          %v1724 = vld [vmem:[%s1351 + $0x28] sm:$0xf]
          %v1725 = vld [vmem:[%s1351 + $0x2c] sm:$0x1]
          %v1726 = vld [vmem:[%s1351 + $0x30] sm:$0xe]
          %v1727 = vld [vmem:[%s1351 + $0x34] sm:$0xf]
          %v1728 = vld [vmem:[%s1351 + $0x38] sm:$0x1]
          %v1729 = vld [vmem:[%s1351 + $0x3c] sm:$0xe]
          %v1730 = vld [vmem:[%s1351 + $0x40] sm:$0xf]
          %v1731 = vld [vmem:[%s1351 + $0x44] sm:$0x1]
          %v1750 = vrot.slane %v1714, 5
          %v1751 = vrot.slane %v1750, 4
          %v1752 = vrot.slane %v1715, 5
          %v1753 = vsel %vm720, %v1751, %v1752
          %v1754 = vrot.slane %v1752, 4
          %v1755 = vrot.slane %v1716, 5
          %v1756 = vsel %vm720, %v1754, %v1755
          %v1757 = vrot.slane %v1717, 5
          %v1758 = vrot.slane %v1757, 4
          %v1759 = vrot.slane %v1718, 5
          %v1760 = vsel %vm720, %v1758, %v1759
          %v1761 = vrot.slane %v1759, 4
          %v1762 = vrot.slane %v1719, 5
          %v1763 = vsel %vm720, %v1761, %v1762
          %v1764 = vrot.slane %v1720, 5
          %v1765 = vrot.slane %v1764, 4
          %v1766 = vrot.slane %v1721, 5
          %v1767 = vsel %vm720, %v1765, %v1766
          %v1768 = vrot.slane %v1766, 4
          %v1769 = vrot.slane %v1722, 5
          %v1770 = vsel %vm720, %v1768, %v1769
          %v1771 = vrot.slane %v1723, 5
          %v1772 = vrot.slane %v1771, 4
          %v1773 = vrot.slane %v1724, 5
          %v1774 = vsel %vm720, %v1772, %v1773
          %v1775 = vrot.slane %v1773, 4
          %v1776 = vrot.slane %v1725, 5
          %v1777 = vsel %vm720, %v1775, %v1776
          %v1778 = vrot.slane %v1726, 5
          %v1779 = vrot.slane %v1778, 4
          %v1780 = vrot.slane %v1727, 5
          %v1781 = vsel %vm720, %v1779, %v1780
          %v1782 = vrot.slane %v1780, 4
          %v1783 = vrot.slane %v1728, 5
          %v1784 = vsel %vm720, %v1782, %v1783
          %v1785 = vrot.slane %v1729, 5
          %v1786 = vrot.slane %v1785, 4
          %v1787 = vrot.slane %v1730, 5
          %v1788 = vsel %vm720, %v1786, %v1787
          %v1789 = vrot.slane %v1787, 4
          %v1790 = vrot.slane %v1731, 5
          %v1791 = vsel %vm720, %v1789, %v1790
          %v1792 = vunpack.c.l.b16 %v1753
          %v1793 = vunpack.c.l.b16 %v1756
          %v1794 = vunpack.c.l.b16 %v1760
          %v1795 = vunpack.c.l.b16 %v1763
          %v1796 = vunpack.c.l.b16 %v1767
          %v1797 = vunpack.c.l.b16 %v1770
          %v1798 = vunpack.c.l.b16 %v1774
          %v1799 = vunpack.c.l.b16 %v1777
          %v1800 = vunpack.c.l.b16 %v1781
          %v1801 = vunpack.c.l.b16 %v1784
          %v1802 = vunpack.c.l.b16 %v1788
          %v1803 = vunpack.c.l.b16 %v1791
          %v1804 = vpack.c.b16 %v1793, %v1792
          %v1805 = vpack.c.b16 %v1795, %v1794
          %v1806 = vpack.c.b16 %v1797, %v1796
          %v1807 = vpack.c.b16 %v1799, %v1798
          %v1808 = vpack.c.b16 %v1801, %v1800
          %v1809 = vpack.c.b16 %v1803, %v1802
          %1816 = vst.msk [vmem:[#allocation2 + $0x8] sm:$0xff] %vm385, %v1804
          %1817 = vst.msk [vmem:[#allocation2 + $0x18] sm:$0xff] %vm385, %v1805
          %1818 = vst.msk [vmem:[#allocation2 + $0x28] sm:$0xff] %vm385, %v1806
          %1819 = vst.msk [vmem:[#allocation2 + $0x38] sm:$0xff] %vm385, %v1807
          %1820 = vst.msk [vmem:[#allocation2 + $0x48] sm:$0xff] %vm385, %v1808
          %1821 = vst.msk [vmem:[#allocation2 + $0x58] sm:$0xff] %vm385, %v1809
          %v1822 = vld [vmem:[%s305] sm:$0xe]
          %v1823 = vld [vmem:[%s305 + $0x4] sm:$0xf]
          %v1824 = vld [vmem:[%s305 + $0x8] sm:$0x1]
          %v1825 = vld [vmem:[%s305 + $0xc] sm:$0xe]
          %v1826 = vld [vmem:[%s305 + $0x10] sm:$0xf]
          %v1827 = vld [vmem:[%s305 + $0x14] sm:$0x1]
          %v1834 = vrot.slane %v1822, 5
          %v1835 = vrot.slane %v1834, 4
          %v1836 = vrot.slane %v1823, 5
          %v1837 = vsel %vm720, %v1835, %v1836
          %v1838 = vrot.slane %v1836, 4
          %v1839 = vrot.slane %v1824, 5
          %v1840 = vsel %vm720, %v1838, %v1839
          %v1841 = vrot.slane %v1825, 5
          %v1842 = vrot.slane %v1841, 4
          %v1843 = vrot.slane %v1826, 5
          %v1844 = vsel %vm720, %v1842, %v1843
          %v1845 = vrot.slane %v1843, 4
          %v1846 = vrot.slane %v1827, 5
          %v1847 = vsel %vm720, %v1845, %v1846
          %v1848 = vunpack.c.l.b16 %v1837
          %v1849 = vunpack.c.l.b16 %v1840
          %v1850 = vunpack.c.l.b16 %v1844
          %v1851 = vunpack.c.l.b16 %v1847
          %v1852 = vpack.c.b16 %v1849, %v1848
          %v1853 = vpack.c.b16 %v1851, %v1850
          %1856 = vst.msk [vmem:[#allocation2 + $0x68] sm:$0xff] %vm385, %v1852
          %1857 = vst.msk [vmem:[#allocation2 + $0x78] sm:$0xff] %vm385, %v1853
        $region40: #{tpu_custom_call.1} parent=35 // pred_fallthru
          _
        %v1858 = vld [vmem:[#allocation2] sm:$0xff]
        %v1859 = vld [vmem:[#allocation2 + $0x8] sm:$0xff]
        %v1860 = vld [vmem:[#allocation2 + $0x10] sm:$0xff]
        %v1861 = vld [vmem:[#allocation2 + $0x18] sm:$0xff]
        %v1862 = vld [vmem:[#allocation2 + $0x20] sm:$0xff]
        %v1863 = vld [vmem:[#allocation2 + $0x28] sm:$0xff]
        %v1864 = vld [vmem:[#allocation2 + $0x30] sm:$0xff]
        %v1865 = vld [vmem:[#allocation2 + $0x38] sm:$0xff]
        %v1866 = vld [vmem:[#allocation2 + $0x40] sm:$0xff]
        %v1867 = vld [vmem:[#allocation2 + $0x48] sm:$0xff]
        %v1868 = vld [vmem:[#allocation2 + $0x50] sm:$0xff]
        %v1869 = vld [vmem:[#allocation2 + $0x58] sm:$0xff]
        %v1870 = vld [vmem:[#allocation2 + $0x60] sm:$0xff]
        %v1871 = vld [vmem:[#allocation2 + $0x68] sm:$0xff]
        %v1872 = vld [vmem:[#allocation2 + $0x70] sm:$0xff]
        %v1873 = vld [vmem:[#allocation2 + $0x78] sm:$0xff]
        %v1874 = vld [vmem:[%s311] sm:$0xf]
        %v1875 = vld [vmem:[%s311 + $0x4] sm:$0xf]
        %v1876 = vld [vmem:[%s311 + $0x8] sm:$0xf]
        %v1877 = vld [vmem:[%s311 + $0xc] sm:$0xf]
        %v1878 = vld [vmem:[%s311 + $0x10] sm:$0xf]
        %v1879 = vld [vmem:[%s311 + $0x14] sm:$0xf]
        %v1880 = vld [vmem:[%s311 + $0x18] sm:$0xf]
        %v1881 = vld [vmem:[%s311 + $0x1c] sm:$0xf]
        %v1882 = vld [vmem:[%s311 + $0x20] sm:$0xf]
        %v1883 = vld [vmem:[%s311 + $0x24] sm:$0xf]
        %v1884 = vld [vmem:[%s311 + $0x28] sm:$0xf]
        %v1885 = vld [vmem:[%s311 + $0x2c] sm:$0xf]
        %v1886 = vld [vmem:[%s311 + $0x30] sm:$0xf]
        %v1887 = vld [vmem:[%s311 + $0x34] sm:$0xf]
        %v1888 = vld [vmem:[%s311 + $0x38] sm:$0xf]
        %v1889 = vld [vmem:[%s311 + $0x3c] sm:$0xf]
        %v1890 = vld [vmem:[%s311 + $0x40] sm:$0xf]
        %v1891 = vld [vmem:[%s311 + $0x44] sm:$0xf]
        %v1892 = vld [vmem:[%s314] sm:$0x1]
        %v1894 = vlaneseq
        %v1895 = vshrl.u32 %v1894, 7
        %v1896 = vsub.s32 0, %v1895
        %v1897 = vrot.slane %v1892, %v1896
        %v1917 = vunpack.c.l.b16 %v1874
        %v1918 = vunpack.c.l.b16 %v1875
        %v1919 = vunpack.c.l.b16 %v1876
        %v1920 = vunpack.c.l.b16 %v1877
        %v1921 = vunpack.c.l.b16 %v1878
        %v1922 = vunpack.c.l.b16 %v1879
        %v1923 = vunpack.c.l.b16 %v1880
        %v1924 = vunpack.c.l.b16 %v1881
        %v1925 = vunpack.c.l.b16 %v1882
        %v1926 = vunpack.c.l.b16 %v1883
        %v1927 = vunpack.c.l.b16 %v1884
        %v1928 = vunpack.c.l.b16 %v1885
        %v1929 = vunpack.c.l.b16 %v1886
        %v1930 = vunpack.c.l.b16 %v1887
        %v1931 = vunpack.c.l.b16 %v1888
        %v1932 = vunpack.c.l.b16 %v1889
        %v1933 = vunpack.c.l.b16 %v1890
        %v1934 = vunpack.c.l.b16 %v1891
        %v1935 = vpack.c.b16 %v1918, %v1917
        %v1936 = vpack.c.b16 %v1920, %v1919
        %v1937 = vpack.c.b16 %v1922, %v1921
        %v1938 = vpack.c.b16 %v1924, %v1923
        %v1939 = vpack.c.b16 %v1926, %v1925
        %v1940 = vpack.c.b16 %v1928, %v1927
        %v1941 = vpack.c.b16 %v1930, %v1929
        %v1942 = vpack.c.b16 %v1932, %v1931
        %v1943 = vpack.c.b16 %v1934, %v1933
        %vm1953 = vcmask 130048
        %v1955 = vsel %vm1953, %v1859, 0
        %v1958 = vsel %vm1953, %v1861, 0
        %v1961 = vsel %vm1953, %v1863, 0
        %v1964 = vsel %vm1953, %v1865, 0
        %v1967 = vsel %vm1953, %v1867, 0
        %v1970 = vsel %vm1953, %v1869, 0
        %v1973 = vsel %vm1953, %v1871, 0
        %v1976 = vsel %vm1953, %v1873, 0
        %1978 = vmatprep.subr.bf16.mxu0 0
        %1979 = vmatpush1.bf16.msra.mxu0 %v1935
        %1980 = vmatprep.subr.bf16.mxu0 0
        %1981 = vmatpush1.bf16.msra.mxu0 %v1936
        %1982 = vmatprep.subr.bf16.mxu0 0
        %1983 = vmatpush1.bf16.msra.mxu0 %v1937
        %1984 = vmatprep.subr.bf16.mxu0 0
        %1985 = vmatpush1.bf16.msra.mxu0 %v1938
        %1986 = vmatprep.subr.bf16.mxu0 0
        %1987 = vmatpush1.bf16.msra.mxu0 %v1939
        %1988 = vmatprep.subr.bf16.mxu0 0
        %1989 = vmatpush1.bf16.msra.mxu0 %v1940
        %1990 = vmatprep.subr.bf16.mxu0 0
        %1991 = vmatpush1.bf16.msra.mxu0 %v1941
        %1992 = vmatprep.subr.bf16.mxu0 0
        %1993 = vmatpush1.bf16.msra.mxu0 %v1942
        %1994 = vmatprep.subr.bf16.mxu0 0
        %1995 = vmatpush1.bf16.msra.mxu0 %v1943
        %1996 = vmatprep.subr.bf16.mxu0 0
        %1997 = vmatpush1.bf16.msra.mxu0 0
        %1998 = vmatprep.subr.bf16.mxu0 0
        %1999 = vmatpush1.bf16.msra.mxu0 0
        %2000 = vmatprep.subr.bf16.mxu0 0
        %2001 = vmatpush1.bf16.msra.mxu0 0
        %2002 = vmatprep.subr.bf16.mxu0 0
        %2003 = vmatpush1.bf16.msra.mxu0 0
        %2004 = vmatprep.subr.bf16.mxu0 0
        %2005 = vmatpush1.bf16.msra.mxu0 0
        %2006 = vmatprep.subr.bf16.mxu0 0
        %2007 = vmatpush1.bf16.msra.mxu0 0
        %2008 = vmatprep.subr.bf16.mxu0 0
        %2009 = vmatpush1.bf16.msra.mxu0 0
        %2010 = vmatprep.mubr.bf16.mxu0 %v1955
        %2011 = vmatmul.mubr.bf16.gmra.mrb[0].mxu0 %v1858
        %v2012 = vpop.f32.mrb[0].mxu0
        %v2013 = vadd.f32 %v1897, %v2012
        %v2014 = vpop.f32.mrb[0].mxu0
        %v2015 = vpop.f32.mrb[0].mxu0
        %v2016 = vadd.f32 %v1897, %v2015
        %v2017 = vpop.f32.mrb[0].mxu0
        %2018 = vmatprep.mubr.bf16.mxu0 %v1958
        %2019 = vmatmul.mubr.bf16.gmra.mrb[0].mxu0 %v1860
        %v2020 = vpop.f32.mrb[0].mxu0
        %v2021 = vadd.f32 %v1897, %v2020
        %v2022 = vpop.f32.mrb[0].mxu0
        %v2023 = vpop.f32.mrb[0].mxu0
        %v2024 = vadd.f32 %v1897, %v2023
        %v2025 = vpop.f32.mrb[0].mxu0
        %2026 = vmatprep.mubr.bf16.mxu0 %v1961
        %2027 = vmatmul.mubr.bf16.gmra.mrb[0].mxu0 %v1862
        %v2028 = vpop.f32.mrb[0].mxu0
        %v2029 = vadd.f32 %v1897, %v2028
        %v2030 = vpop.f32.mrb[0].mxu0
        %v2031 = vpop.f32.mrb[0].mxu0
        %v2032 = vadd.f32 %v1897, %v2031
        %v2033 = vpop.f32.mrb[0].mxu0
        %2034 = vmatprep.mubr.bf16.mxu0 %v1964
        %2035 = vmatmul.mubr.bf16.gmra.mrb[0].mxu0 %v1864
        %v2036 = vpop.f32.mrb[0].mxu0
        %v2037 = vadd.f32 %v1897, %v2036
        %v2038 = vpop.f32.mrb[0].mxu0
        %v2039 = vpop.f32.mrb[0].mxu0
        %v2040 = vadd.f32 %v1897, %v2039
        %v2041 = vpop.f32.mrb[0].mxu0
        %2042 = vmatprep.mubr.bf16.mxu0 %v1967
        %2043 = vmatmul.mubr.bf16.gmra.mrb[0].mxu0 %v1866
        %v2044 = vpop.f32.mrb[0].mxu0
        %v2045 = vadd.f32 %v1897, %v2044
        %v2046 = vpop.f32.mrb[0].mxu0
        %v2047 = vpop.f32.mrb[0].mxu0
        %v2048 = vadd.f32 %v1897, %v2047
        %v2049 = vpop.f32.mrb[0].mxu0
        %2050 = vmatprep.mubr.bf16.mxu0 %v1970
        %2051 = vmatmul.mubr.bf16.gmra.mrb[0].mxu0 %v1868
        %v2052 = vpop.f32.mrb[0].mxu0
        %v2053 = vadd.f32 %v1897, %v2052
        %v2054 = vpop.f32.mrb[0].mxu0
        %v2055 = vpop.f32.mrb[0].mxu0
        %v2056 = vadd.f32 %v1897, %v2055
        %v2057 = vpop.f32.mrb[0].mxu0
        %2058 = vmatprep.mubr.bf16.mxu0 %v1973
        %2059 = vmatmul.mubr.bf16.gmra.mrb[0].mxu0 %v1870
        %v2060 = vpop.f32.mrb[0].mxu0
        %v2061 = vadd.f32 %v1897, %v2060
        %v2062 = vpop.f32.mrb[0].mxu0
        %v2063 = vpop.f32.mrb[0].mxu0
        %v2064 = vadd.f32 %v1897, %v2063
        %v2065 = vpop.f32.mrb[0].mxu0
        %2066 = vmatprep.mubr.bf16.mxu0 %v1976
        %2067 = vmatmul.mubr.bf16.gmra.mrb[0].mxu0 %v1872
        %v2068 = vpop.f32.mrb[0].mxu0
        %v2069 = vadd.f32 %v1897, %v2068
        %v2070 = vpop.f32.mrb[0].mxu0
        %v2071 = vpop.f32.mrb[0].mxu0
        %v2072 = vadd.f32 %v1897, %v2071
        %v2073 = vpop.f32.mrb[0].mxu0
        %2074 = vdwg.mxu0
        %v2075 = vmul.f32 %v2013, 0.2
        %v2076 = vmul.f32 %v2016, 0.2
        %v2077 = vmul.f32 %v2021, 0.2
        %v2078 = vmul.f32 %v2024, 0.2
        %v2079 = vmul.f32 %v2029, 0.2
        %v2080 = vmul.f32 %v2032, 0.2
        %v2081 = vmul.f32 %v2037, 0.2
        %v2082 = vmul.f32 %v2040, 0.2
        %v2083 = vmul.f32 %v2045, 0.2
        %v2084 = vmul.f32 %v2048, 0.2
        %v2085 = vmul.f32 %v2053, 0.2
        %v2086 = vmul.f32 %v2056, 0.2
        %v2087 = vmul.f32 %v2061, 0.2
        %v2088 = vmul.f32 %v2064, 0.2
        %v2089 = vmul.f32 %v2069, 0.2
        %v2090 = vmul.f32 %v2072, 0.2
        %v2091 = vmax.f32 %v2013, %v2075
        %v2092 = vmax.f32 %v2016, %v2076
        %v2093 = vmax.f32 %v2021, %v2077
        %v2094 = vmax.f32 %v2024, %v2078
        %v2095 = vmax.f32 %v2029, %v2079
        %v2096 = vmax.f32 %v2032, %v2080
        %v2097 = vmax.f32 %v2037, %v2081
        %v2098 = vmax.f32 %v2040, %v2082
        %v2099 = vmax.f32 %v2045, %v2083
        %v2100 = vmax.f32 %v2048, %v2084
        %v2101 = vmax.f32 %v2053, %v2085
        %v2102 = vmax.f32 %v2056, %v2086
        %v2103 = vmax.f32 %v2061, %v2087
        %v2104 = vmax.f32 %v2064, %v2088
        %v2105 = vmax.f32 %v2069, %v2089
        %v2106 = vmax.f32 %v2072, %v2090
        %2107 = vst [vmem:[%s283] sm:$0xff] %v2091
        %2108 = vst [vmem:[%s283 + $0x8] sm:$0xff] %v2092
        %2109 = vst [vmem:[%s283 + $0x10] sm:$0xff] %v2093
        %2110 = vst [vmem:[%s283 + $0x18] sm:$0xff] %v2094
        %2111 = vst [vmem:[%s283 + $0x20] sm:$0xff] %v2095
        %2112 = vst [vmem:[%s283 + $0x28] sm:$0xff] %v2096
        %2113 = vst [vmem:[%s283 + $0x30] sm:$0xff] %v2097
        %2114 = vst [vmem:[%s283 + $0x38] sm:$0xff] %v2098
        %2115 = vst [vmem:[%s283 + $0x40] sm:$0xff] %v2099
        %2116 = vst [vmem:[%s283 + $0x48] sm:$0xff] %v2100
        %2117 = vst [vmem:[%s283 + $0x50] sm:$0xff] %v2101
        %2118 = vst [vmem:[%s283 + $0x58] sm:$0xff] %v2102
        %2119 = vst [vmem:[%s283 + $0x60] sm:$0xff] %v2103
        %2120 = vst [vmem:[%s283 + $0x68] sm:$0xff] %v2104
        %2121 = vst [vmem:[%s283 + $0x70] sm:$0xff] %v2105
        %2122 = vst [vmem:[%s283 + $0x78] sm:$0xff] %v2106
        %s2123 = sand.u32 %s159, 1
        %s2124 = scalar_lea.sflag [#allocation4], %s2123
        %s2125 = sand.u32 %s159, 1
        %s2126 = smul.addr %s2125, 128
        %s2127 = scalar_lea.vmem [#allocation3], %s2126
        // Predicated region
        $region41: #{tpu_custom_call.1} parent=35 // pred_check
          %p2128 = pneg %p169
        $region42: #{tpu_custom_call.1} parent=35 // pred_check_branch
          %2130 = sbr.rel (%p2128) target = $region44
        $region43: #{tpu_custom_call.1} parent=35 // pred_region
          %s2131 = smul.u32 16, %s24
          %s2133 = ssub.s32 2048, 2048
          %2134 = vsyncadd %s2124, %s2133
          %s2135 = sadd.s32 %s25, %s2131
          %s2136 = smul.addr %s23, 32
          %s2137 = sadd.s32 %s2135, %s2136
          %s2138 = smul.addr %s2137, 128
          %s2139 = scalar_lea.hbm %s4, %s2138
          %s2140 = sshll.u32 %s2127, 4
          %s2141 = int_to_ptr.vmem [resolvable:$true] %s2140
          %2146 = dma.vmem_to_hbm [thread:$0]  %s2141, 2048, %s2139, %s2124, 128, 128, 8
        $region44: #{tpu_custom_call.1} parent=35 // pred_fallthru
          _
      $region36: #{tpu_custom_call.1} parent=5 // pred_fallthru
        _
      %p2147 = scmp.le.s32.totalorder 2, %s13
      // Predicated region
      $region45: #{tpu_custom_call.1} parent=5 // pred_check
        %p2148 = pneg %p2147
      $region46: #{tpu_custom_call.1} parent=5 // pred_check_branch
        %2150 = sbr.rel (%p2148) target = $region48
      $region47: #{tpu_custom_call.1} parent=5 // pred_region
        %s2151 = ssub.s32 %s13, 2
        // Predicated region
        $region49: #{tpu_custom_call.1} parent=47 // pred_check
          %p2152 = pneg %p175
        $region50: #{tpu_custom_call.1} parent=47 // pred_check_branch
          %2154 = sbr.rel (%p2152) target = $region52
        $region51: #{tpu_custom_call.1} parent=47 // pred_region
          %s2155 = sand.u32 %s160, 1
          %s2156 = scalar_lea.sflag [#allocation4], %s2155
          %s2157 = sand.u32 %s160, 1
          %s2158 = smul.addr %s2157, 128
          %s2159 = scalar_lea.vmem [#allocation3], %s2158
          %2160 = dma.done %s2156, 2048
        $region52: #{tpu_custom_call.1} parent=47 // pred_fallthru
          _
      $region48: #{tpu_custom_call.1} parent=5 // pred_fallthru
        _
    $region6: #{tpu_custom_call.1} parent=1 // loop_footer
      %s17 = sadd.s32 1, %s13
    $region7: #{tpu_custom_call.1} parent=1 // loop_footer_branch
      %12 = sbr.rel target = $region3
    $region8: #{tpu_custom_call.1} parent=1 // loop_exit
      _
    %2161 = vsyncpa [#allocation4], 1
    %s2162 = scalar_lea.sflag [#allocation4], 1
    %2163 = vsyncpa %s2162, 1

</llo_original>
